<compile_context>
chip_gen: v7x
topology: tpu7x:2x2x1
jax: 0.10.0
libtpu: 0.0.40
codegen_flags: <defaults>
</compile_context>

<pallas_src>
import math

import jax
import jax.numpy as jnp
from jax.experimental import pallas as pl
from jax.experimental.pallas import tpu as pltpu

CHARACTERS_NUMBER = 129
HIDDEN_SIZE = 128
INPUT_SIZE = 2
PADDED_OUT = 256                         # 129 logits padded to a lane-dense 256
FUSED_OUT = HIDDEN_SIZE + PADDED_OUT     # fused [i2h | padded i2o] width = 384
NEG_BIG = -1e30                          # bias for padded logit lanes


def _rnn_seq_kernel(inp_ref,                       # (T, 2) f32 in SMEM
                    h0_ref,                        # (1, 128) f32
                    w_in_ref, b_in_ref,            # (2,128) f32, (1,128) f32
                    w_con_top_ref, w_con_bot_ref,  # (128,256) bf16 each
                    b_con_ref,                     # (1,256) f32
                    w_hid_ref, b_hid_ref,          # (256,128) bf16, (1,128) f32
                    w_out_ref, b_out_ref,          # (128,384) bf16, (1,384) f32
                    logp_ref,                      # (1,1,256) f32 per step
                    nh_ref,                        # (1,128) f32 (resident)
                    h_scratch):                    # (1,128) f32 carry
    t = pl.program_id(0)

    @pl.when(t == 0)
    def _():
        h_scratch[...] = h0_ref[...]

    # input layer: (1,2)@(2,128) replaced by two scalar FMAs on the VPU
    x0 = inp_ref[t, 0]
    x1 = inp_ref[t, 1]
    hidden = x0 * w_in_ref[0:1, :] + x1 * w_in_ref[1:2, :] + b_in_ref[...]

    h = h_scratch[...]

    # conecting layer: concat eliminated by splitting W into top/bottom halves
    hidden1 = (jnp.dot(hidden.astype(jnp.bfloat16), w_con_top_ref[...],
                       preferred_element_type=jnp.float32)
               + jnp.dot(h.astype(jnp.bfloat16), w_con_bot_ref[...],
                         preferred_element_type=jnp.float32)
               + b_con_ref[...])

    hidden2 = jnp.maximum(
        jnp.dot(hidden1.astype(jnp.bfloat16), w_hid_ref[...],
                preferred_element_type=jnp.float32) + b_hid_ref[...], 0.0)

    # fused i2h (128 cols) + padded i2o (256 cols) -> one MXU pass
    fused = jnp.dot(hidden2.astype(jnp.bfloat16), w_out_ref[...],
                    preferred_element_type=jnp.float32) + b_out_ref[...]

    nh = jnp.maximum(fused[:, :HIDDEN_SIZE], 0.0)     # (1,128)
    logits = fused[:, HIDDEN_SIZE:]                   # (1,256); pads hold -1e30

    m = jnp.max(logits, axis=-1, keepdims=True)
    lse = jnp.log(jnp.sum(jnp.exp(logits - m), axis=-1, keepdims=True))
    logp = logits - m - lse

    logp_ref[...] = logp.reshape(1, 1, PADDED_OUT)
    nh_ref[...] = nh          # resident output block -> final hidden at the end
    h_scratch[...] = nh


def init_params(key):
    """PyTorch Linear-style init; weights stored as (in, out), biases 1-D."""
    def linear(key, fan_in, fan_out):
        kw, kb = jax.random.split(key)
        bound = 1.0 / math.sqrt(fan_in)
        w = jax.random.uniform(kw, (fan_in, fan_out), jnp.float32, -bound, bound)
        b = jax.random.uniform(kb, (fan_out,), jnp.float32, -bound, bound)
        return w, b

    ks = jax.random.split(key, 5)
    w_in, b_in = linear(ks[0], INPUT_SIZE, HIDDEN_SIZE)
    w_con, b_con = linear(ks[1], 2 * HIDDEN_SIZE, 2 * HIDDEN_SIZE)
    w_hid, b_hid = linear(ks[2], 2 * HIDDEN_SIZE, HIDDEN_SIZE)
    w_i2o, b_i2o = linear(ks[3], HIDDEN_SIZE, CHARACTERS_NUMBER)
    w_i2h, b_i2h = linear(ks[4], HIDDEN_SIZE, HIDDEN_SIZE)
    return dict(w_in=w_in, b_in=b_in, w_con=w_con, b_con=b_con,
                w_hid=w_hid, b_hid=b_hid, w_i2h=w_i2h, b_i2h=b_i2h,
                w_i2o=w_i2o, b_i2o=b_i2o)


def pack_params(p):
    """Re-layout / split / fuse / pad the params for the kernel."""
    f32, bf16 = jnp.float32, jnp.bfloat16
    w_i2o_pad = jnp.pad(p["w_i2o"], ((0, 0), (0, PADDED_OUT - CHARACTERS_NUMBER)))
    b_i2o_pad = jnp.concatenate(
        [p["b_i2o"], jnp.full((PADDED_OUT - CHARACTERS_NUMBER,), NEG_BIG, f32)])
    return dict(
        w_in=p["w_in"].astype(f32),                          # small; stays f32 (VPU path)
        b_in=p["b_in"].reshape(1, HIDDEN_SIZE).astype(f32),
        w_con_top=p["w_con"][:HIDDEN_SIZE].astype(bf16),     # (128, 256)
        w_con_bot=p["w_con"][HIDDEN_SIZE:].astype(bf16),     # (128, 256)
        b_con=p["b_con"].reshape(1, 2 * HIDDEN_SIZE).astype(f32),
        w_hid=p["w_hid"].astype(bf16),                       # (256, 128)
        b_hid=p["b_hid"].reshape(1, HIDDEN_SIZE).astype(f32),
        w_out=jnp.concatenate([p["w_i2h"], w_i2o_pad], axis=1).astype(bf16),  # (128,384)
        b_out=jnp.concatenate([p["b_i2h"], b_i2o_pad]).reshape(1, FUSED_OUT).astype(f32),
    )


def password_getting_net_forward(inp_seq, h0, packed):
    """Run the cell over a whole sequence in one pallas_call.

    inp_seq: (T, 2) f32, h0: (128,) f32.
    Returns (log_probs (T, 129) f32, final_hidden (128,) f32).
    """
    T = inp_seq.shape[0]
    inp_seq = inp_seq.astype(jnp.float32)
    h0_2d = h0.reshape(1, HIDDEN_SIZE).astype(jnp.float32)

    def resident(shape):
        zeros = (0,) * len(shape)
        return pl.BlockSpec(shape, lambda t: zeros)   # constant index -> DMA'd once

    grid_spec = pltpu.PrefetchScalarGridSpec(
        num_scalar_prefetch=0,
        grid=(T,),
        in_specs=[
            pl.BlockSpec(memory_space=pltpu.MemorySpace.SMEM),   # inp_seq scalars
            resident((1, HIDDEN_SIZE)),                          # h0
            resident((INPUT_SIZE, HIDDEN_SIZE)),                 # w_in
            resident((1, HIDDEN_SIZE)),                          # b_in
            resident((HIDDEN_SIZE, 2 * HIDDEN_SIZE)),            # w_con_top
            resident((HIDDEN_SIZE, 2 * HIDDEN_SIZE)),            # w_con_bot
            resident((1, 2 * HIDDEN_SIZE)),                      # b_con
            resident((2 * HIDDEN_SIZE, HIDDEN_SIZE)),            # w_hid
            resident((1, HIDDEN_SIZE)),                          # b_hid
            resident((HIDDEN_SIZE, FUSED_OUT)),                  # w_out (fused)
            resident((1, FUSED_OUT)),                            # b_out (fused)
        ],
        out_specs=(
            pl.BlockSpec((1, 1, PADDED_OUT), lambda t: (t, 0, 0)),  # per-step log-probs
            pl.BlockSpec((1, HIDDEN_SIZE), lambda t: (0, 0)),       # final hidden
        ),
        scratch_shapes=[pltpu.VMEM((1, HIDDEN_SIZE), jnp.float32)],
    )

    logp3, nh2 = pl.pallas_call(
        _rnn_seq_kernel,
        grid_spec=grid_spec,
        out_shape=(
            jax.ShapeDtypeStruct((T, 1, PADDED_OUT), jnp.float32),
            jax.ShapeDtypeStruct((1, HIDDEN_SIZE), jnp.float32),
        ),
        compiler_params=pltpu.CompilerParams(
            dimension_semantics=("arbitrary",)),
    )(inp_seq, h0_2d,
      packed["w_in"], packed["b_in"],
      packed["w_con_top"], packed["w_con_bot"], packed["b_con"],
      packed["w_hid"], packed["b_hid"],
      packed["w_out"], packed["b_out"])

    return (logp3.reshape(T, PADDED_OUT)[:, :CHARACTERS_NUMBER],
            nh2.reshape(HIDDEN_SIZE))


def reference_forward_seq(inp_seq, h0, p):
    """Pure-JAX reference (same bf16 weight/activation casts as the kernel)."""
    bf16 = jnp.bfloat16
    w_con = p["w_con"].astype(bf16)
    w_hid = p["w_hid"].astype(bf16)
    w_i2h = p["w_i2h"].astype(bf16)
    w_i2o = p["w_i2o"].astype(bf16)

    outs = []
    h = h0.astype(jnp.float32)
    for t in range(inp_seq.shape[0]):
        x = inp_seq[t]
        hidden = x[0] * p["w_in"][0] + x[1] * p["w_in"][1] + p["b_in"]
        hidden1 = (jnp.dot(hidden.astype(bf16), w_con[:HIDDEN_SIZE],
                           preferred_element_type=jnp.float32)
                   + jnp.dot(h.astype(bf16), w_con[HIDDEN_SIZE:],
                             preferred_element_type=jnp.float32)
                   + p["b_con"])
        hidden2 = jnp.maximum(
            jnp.dot(hidden1.astype(bf16), w_hid,
                    preferred_element_type=jnp.float32) + p["b_hid"], 0.0)
        h = jnp.maximum(
            jnp.dot(hidden2.astype(bf16), w_i2h,
                    preferred_element_type=jnp.float32) + p["b_i2h"], 0.0)
        logits = jnp.dot(hidden2.astype(bf16), w_i2o,
                         preferred_element_type=jnp.float32) + p["b_i2o"]
        outs.append(jax.nn.log_softmax(logits))
    return jnp.stack(outs), h


if __name__ == "__main__":
    key = jax.random.PRNGKey(0)
    kp, ki, kh = jax.random.split(key, 3)
    params = init_params(kp)
    packed = pack_params(params)

    T = 8  # small example sequence length
    inp_seq = jax.random.normal(ki, (T, INPUT_SIZE), jnp.float32)
    h0 = jax.random.normal(kh, (HIDDEN_SIZE,), jnp.float32)

    out, nh = password_getting_net_forward(inp_seq, h0, packed)
    jax.block_until_ready((out, nh))

    ref_out, ref_nh = reference_forward_seq(inp_seq, h0, params)

    assert out.shape == (T, CHARACTERS_NUMBER) and nh.shape == (HIDDEN_SIZE,)
    assert jnp.allclose(out, ref_out, atol=1e-2, rtol=1e-2)
    assert jnp.allclose(nh, ref_nh, atol=1e-2, rtol=1e-2)

    print("KERNEL_OK")
</pallas_src>

<mosaic_0001>
module attributes {stable_mosaic.version = 11 : i64} {
  func.func @_rnn_seq_kernel(%arg0: i32, %arg1: memref<8x2xf32, #tpu.memory_space<smem>>, %arg2: memref<1x128xf32, #tpu.memory_space<vmem>>, %arg3: memref<2x128xf32, #tpu.memory_space<vmem>>, %arg4: memref<1x128xf32, #tpu.memory_space<vmem>>, %arg5: memref<128x256xbf16, #tpu.memory_space<vmem>>, %arg6: memref<128x256xbf16, #tpu.memory_space<vmem>>, %arg7: memref<1x256xf32, #tpu.memory_space<vmem>>, %arg8: memref<256x128xbf16, #tpu.memory_space<vmem>>, %arg9: memref<1x128xf32, #tpu.memory_space<vmem>>, %arg10: memref<128x384xbf16, #tpu.memory_space<vmem>>, %arg11: memref<1x384xf32, #tpu.memory_space<vmem>>, %arg12: memref<1x1x256xf32, #tpu.memory_space<vmem>>, %arg13: memref<1x128xf32, #tpu.memory_space<vmem>>, %arg14: memref<1x128xf32, #tpu.memory_space<vmem>>) attributes {dimension_semantics = [#tpu.dimension_semantics<arbitrary>], iteration_bounds = array<i64: 8>, scalar_prefetch = 0 : i64, scratch_operands = 1 : i64, tpu.core_type = #tpu.core_type<tc>, window_params = [{transform_indices = @transform_0, window_bounds = array<i64: 8, 2>}, {pipeline_mode = #tpu.pipeline_mode<synchronous>, transform_indices = @transform_1, window_bounds = array<i64: 1, 128>}, {pipeline_mode = #tpu.pipeline_mode<synchronous>, transform_indices = @transform_2, window_bounds = array<i64: 2, 128>}, {pipeline_mode = #tpu.pipeline_mode<synchronous>, transform_indices = @transform_3, window_bounds = array<i64: 1, 128>}, {pipeline_mode = #tpu.pipeline_mode<synchronous>, transform_indices = @transform_4, window_bounds = array<i64: 128, 256>}, {pipeline_mode = #tpu.pipeline_mode<synchronous>, transform_indices = @transform_5, window_bounds = array<i64: 128, 256>}, {pipeline_mode = #tpu.pipeline_mode<synchronous>, transform_indices = @transform_6, window_bounds = array<i64: 1, 256>}, {pipeline_mode = #tpu.pipeline_mode<synchronous>, transform_indices = @transform_7, window_bounds = array<i64: 256, 128>}, {pipeline_mode = #tpu.pipeline_mode<synchronous>, transform_indices = @transform_8, window_bounds = array<i64: 1, 128>}, {pipeline_mode = #tpu.pipeline_mode<synchronous>, transform_indices = @transform_9, window_bounds = array<i64: 128, 384>}, {pipeline_mode = #tpu.pipeline_mode<synchronous>, transform_indices = @transform_10, window_bounds = array<i64: 1, 384>}, {transform_indices = @transform_11, window_bounds = array<i64: 1, 1, 256>}, {pipeline_mode = #tpu.pipeline_mode<synchronous>, transform_indices = @transform_12, window_bounds = array<i64: 1, 128>}]} {
    %c0_i32 = arith.constant 0 : i32
    %0 = arith.cmpi eq, %arg0, %c0_i32 : i32
    %1 = arith.extui %0 : i1 to i32
    %c0_i32_0 = arith.constant 0 : i32
    %2 = arith.cmpi ne, %1, %c0_i32_0 : i32
    scf.if %2 {
      %c0_37 = arith.constant 0 : index
      %c0_38 = arith.constant 0 : index
      %58 = vector.load %arg2[%c0_37, %c0_38] : memref<1x128xf32, #tpu.memory_space<vmem>>, vector<1x128xf32>
      %c0_39 = arith.constant 0 : index
      %c0_40 = arith.constant 0 : index
      %59 = vector.load %arg14[%c0_39, %c0_40] : memref<1x128xf32, #tpu.memory_space<vmem>>, vector<1x128xf32>
      tpu.vector_store %arg14[%c0_39, %c0_40], %58 {strides = array<i32>} : memref<1x128xf32, #tpu.memory_space<vmem>>, vector<1x128xf32>,
    } else {
    }
    %3 = arith.index_cast %arg0 : i32 to index
    %c0 = arith.constant 0 : index
    %4 = memref.load %arg1[%3, %c0] : memref<8x2xf32, #tpu.memory_space<smem>>
    %5 = arith.index_cast %arg0 : i32 to index
    %c1 = arith.constant 1 : index
    %6 = memref.load %arg1[%5, %c1] : memref<8x2xf32, #tpu.memory_space<smem>>
    %c0_1 = arith.constant 0 : index
    %c0_2 = arith.constant 0 : index
    %7 = vector.load %arg3[%c0_1, %c0_2] : memref<2x128xf32, #tpu.memory_space<vmem>>, vector<1x128xf32>
    %8 = vector.broadcast %4 : f32 to vector<1x128xf32>
    %9 = arith.mulf %8, %7 : vector<1x128xf32>
    %c1_3 = arith.constant 1 : index
    %c0_4 = arith.constant 0 : index
    %10 = vector.load %arg3[%c1_3, %c0_4] : memref<2x128xf32, #tpu.memory_space<vmem>>, vector<1x128xf32>
    %11 = vector.broadcast %6 : f32 to vector<1x128xf32>
    %12 = arith.mulf %11, %10 : vector<1x128xf32>
    %13 = arith.addf %9, %12 : vector<1x128xf32>
    %c0_5 = arith.constant 0 : index
    %c0_6 = arith.constant 0 : index
    %14 = vector.load %arg4[%c0_5, %c0_6] : memref<1x128xf32, #tpu.memory_space<vmem>>, vector<1x128xf32>
    %15 = arith.addf %13, %14 : vector<1x128xf32>
    %c0_7 = arith.constant 0 : index
    %c0_8 = arith.constant 0 : index
    %16 = vector.load %arg14[%c0_7, %c0_8] : memref<1x128xf32, #tpu.memory_space<vmem>>, vector<1x128xf32>
    %17 = arith.truncf %15 : vector<1x128xf32> to vector<1x128xbf16>
    %c0_9 = arith.constant 0 : index
    %c0_10 = arith.constant 0 : index
    %18 = vector.load %arg5[%c0_9, %c0_10] : memref<128x256xbf16, #tpu.memory_space<vmem>>, vector<128x256xbf16>
    %cst = arith.constant dense<0.000000e+00> : vector<1x256xf32>
    %19 = tpu.matmul %17, %18, %cst {dimension_numbers = #tpu.dot_dimension_numbers<[1], [0], [0], [1], [0, 0, 1, 1], [], []>} : vector<1x128xbf16>, vector<128x256xbf16>, vector<1x256xf32> -> vector<1x256xf32>
    %20 = arith.truncf %16 : vector<1x128xf32> to vector<1x128xbf16>
    %c0_11 = arith.constant 0 : index
    %c0_12 = arith.constant 0 : index
    %21 = vector.load %arg6[%c0_11, %c0_12] : memref<128x256xbf16, #tpu.memory_space<vmem>>, vector<128x256xbf16>
    %cst_13 = arith.constant dense<0.000000e+00> : vector<1x256xf32>
    %22 = tpu.matmul %20, %21, %cst_13 {dimension_numbers = #tpu.dot_dimension_numbers<[1], [0], [0], [1], [0, 0, 1, 1], [], []>} : vector<1x128xbf16>, vector<128x256xbf16>, vector<1x256xf32> -> vector<1x256xf32>
    %23 = arith.addf %19, %22 : vector<1x256xf32>
    %c0_14 = arith.constant 0 : index
    %c0_15 = arith.constant 0 : index
    %24 = vector.load %arg7[%c0_14, %c0_15] : memref<1x256xf32, #tpu.memory_space<vmem>>, vector<1x256xf32>
    %25 = arith.addf %23, %24 : vector<1x256xf32>
    %26 = arith.truncf %25 : vector<1x256xf32> to vector<1x256xbf16>
    %c0_16 = arith.constant 0 : index
    %c0_17 = arith.constant 0 : index
    %27 = vector.load %arg8[%c0_16, %c0_17] : memref<256x128xbf16, #tpu.memory_space<vmem>>, vector<256x128xbf16>
    %cst_18 = arith.constant dense<0.000000e+00> : vector<1x128xf32>
    %28 = tpu.matmul %26, %27, %cst_18 {dimension_numbers = #tpu.dot_dimension_numbers<[1], [0], [0], [1], [0, 0, 1, 1], [], []>} : vector<1x256xbf16>, vector<256x128xbf16>, vector<1x128xf32> -> vector<1x128xf32>
    %c0_19 = arith.constant 0 : index
    %c0_20 = arith.constant 0 : index
    %29 = vector.load %arg9[%c0_19, %c0_20] : memref<1x128xf32, #tpu.memory_space<vmem>>, vector<1x128xf32>
    %30 = arith.addf %28, %29 : vector<1x128xf32>
    %cst_21 = arith.constant 0.000000e+00 : f32
    %31 = vector.broadcast %cst_21 : f32 to vector<1x128xf32>
    %32 = arith.maximumf %30, %31 : vector<1x128xf32>
    %33 = arith.truncf %32 : vector<1x128xf32> to vector<1x128xbf16>
    %c0_22 = arith.constant 0 : index
    %c0_23 = arith.constant 0 : index
    %34 = vector.load %arg10[%c0_22, %c0_23] : memref<128x384xbf16, #tpu.memory_space<vmem>>, vector<128x384xbf16>
    %cst_24 = arith.constant dense<0.000000e+00> : vector<1x384xf32>
    %35 = tpu.matmul %33, %34, %cst_24 {dimension_numbers = #tpu.dot_dimension_numbers<[1], [0], [0], [1], [0, 0, 1, 1], [], []>} : vector<1x128xbf16>, vector<128x384xbf16>, vector<1x384xf32> -> vector<1x384xf32>
    %c0_25 = arith.constant 0 : index
    %c0_26 = arith.constant 0 : index
    %36 = vector.load %arg11[%c0_25, %c0_26] : memref<1x384xf32, #tpu.memory_space<vmem>>, vector<1x384xf32>
    %37 = arith.addf %35, %36 : vector<1x384xf32>
    %38 = vector.extract_strided_slice %37 {offsets = [0, 0], sizes = [1, 128], strides = [1, 1]} : vector<1x384xf32> to vector<1x128xf32>
    %cst_27 = arith.constant 0.000000e+00 : f32
    %39 = vector.broadcast %cst_27 : f32 to vector<1x128xf32>
    %40 = arith.maximumf %38, %39 : vector<1x128xf32>
    %41 = vector.extract_strided_slice %37 {offsets = [0, 128], sizes = [1, 256], strides = [1, 1]} : vector<1x384xf32> to vector<1x256xf32>
    %cst_28 = arith.constant dense<0xFF800000> : vector<1xf32>
    %42 = vector.multi_reduction <maximumf>, %41, %cst_28 [1] : vector<1x256xf32> to vector<1xf32>
    %43 = vector.shape_cast %42 : vector<1xf32> to vector<1x1xf32>
    %44 = vector.broadcast %43 : vector<1x1xf32> to vector<1x256xf32>
    %45 = arith.subf %41, %44 : vector<1x256xf32>
    %46 = math.exp %45 : vector<1x256xf32>
    %cst_29 = arith.constant dense<0.000000e+00> : vector<1xf32>
    %47 = vector.multi_reduction <add>, %46, %cst_29 [1] : vector<1x256xf32> to vector<1xf32>
    %48 = vector.shape_cast %47 : vector<1xf32> to vector<1x1xf32>
    %49 = math.log %48 : vector<1x1xf32>
    %50 = vector.broadcast %43 : vector<1x1xf32> to vector<1x256xf32>
    %51 = arith.subf %41, %50 : vector<1x256xf32>
    %52 = vector.broadcast %49 : vector<1x1xf32> to vector<1x256xf32>
    %53 = arith.subf %51, %52 : vector<1x256xf32>
    %54 = vector.shape_cast %53 : vector<1x256xf32> to vector<1x1x256xf32>
    %c0_30 = arith.constant 0 : index
    %c0_31 = arith.constant 0 : index
    %c0_32 = arith.constant 0 : index
    %55 = vector.load %arg12[%c0_30, %c0_31, %c0_32] : memref<1x1x256xf32, #tpu.memory_space<vmem>>, vector<1x1x256xf32>
    tpu.vector_store %arg12[%c0_30, %c0_31, %c0_32], %54 {strides = array<i32>} : memref<1x1x256xf32, #tpu.memory_space<vmem>>, vector<1x1x256xf32>,
    %c0_33 = arith.constant 0 : index
    %c0_34 = arith.constant 0 : index
    %56 = vector.load %arg13[%c0_33, %c0_34] : memref<1x128xf32, #tpu.memory_space<vmem>>, vector<1x128xf32>
    tpu.vector_store %arg13[%c0_33, %c0_34], %40 {strides = array<i32>} : memref<1x128xf32, #tpu.memory_space<vmem>>, vector<1x128xf32>,
    %c0_35 = arith.constant 0 : index
    %c0_36 = arith.constant 0 : index
    %57 = vector.load %arg14[%c0_35, %c0_36] : memref<1x128xf32, #tpu.memory_space<vmem>>, vector<1x128xf32>
    tpu.vector_store %arg14[%c0_35, %c0_36], %40 {strides = array<i32>} : memref<1x128xf32, #tpu.memory_space<vmem>>, vector<1x128xf32>,
    return
  }
  func.func @transform_0(%arg0: i32) -> (i32, i32) {
    %c0_i32 = arith.constant 0 : i32
    %c0_i32_0 = arith.constant 0 : i32
    %c0_i32_1 = arith.constant 0 : i32
    return %c0_i32, %c0_i32_0 : i32, i32
  }
  func.func @transform_1(%arg0: i32) -> (i32, i32) {
    %c0_i32 = arith.constant 0 : i32
    %c0_i32_0 = arith.constant 0 : i32
    %c0_i32_1 = arith.constant 0 : i32
    return %c0_i32, %c0_i32_0 : i32, i32
  }
  func.func @transform_2(%arg0: i32) -> (i32, i32) {
    %c0_i32 = arith.constant 0 : i32
    %c0_i32_0 = arith.constant 0 : i32
    %c0_i32_1 = arith.constant 0 : i32
    return %c0_i32, %c0_i32_0 : i32, i32
  }
  func.func @transform_3(%arg0: i32) -> (i32, i32) {
    %c0_i32 = arith.constant 0 : i32
    %c0_i32_0 = arith.constant 0 : i32
    %c0_i32_1 = arith.constant 0 : i32
    return %c0_i32, %c0_i32_0 : i32, i32
  }
  func.func @transform_4(%arg0: i32) -> (i32, i32) {
    %c0_i32 = arith.constant 0 : i32
    %c0_i32_0 = arith.constant 0 : i32
    %c0_i32_1 = arith.constant 0 : i32
    return %c0_i32, %c0_i32_0 : i32, i32
  }
  func.func @transform_5(%arg0: i32) -> (i32, i32) {
    %c0_i32 = arith.constant 0 : i32
    %c0_i32_0 = arith.constant 0 : i32
    %c0_i32_1 = arith.constant 0 : i32
    return %c0_i32, %c0_i32_0 : i32, i32
  }
  func.func @transform_6(%arg0: i32) -> (i32, i32) {
    %c0_i32 = arith.constant 0 : i32
    %c0_i32_0 = arith.constant 0 : i32
    %c0_i32_1 = arith.constant 0 : i32
    return %c0_i32, %c0_i32_0 : i32, i32
  }
  func.func @transform_7(%arg0: i32) -> (i32, i32) {
    %c0_i32 = arith.constant 0 : i32
    %c0_i32_0 = arith.constant 0 : i32
    %c0_i32_1 = arith.constant 0 : i32
    return %c0_i32, %c0_i32_0 : i32, i32
  }
  func.func @transform_8(%arg0: i32) -> (i32, i32) {
    %c0_i32 = arith.constant 0 : i32
    %c0_i32_0 = arith.constant 0 : i32
    %c0_i32_1 = arith.constant 0 : i32
    return %c0_i32, %c0_i32_0 : i32, i32
  }
  func.func @transform_9(%arg0: i32) -> (i32, i32) {
    %c0_i32 = arith.constant 0 : i32
    %c0_i32_0 = arith.constant 0 : i32
    %c0_i32_1 = arith.constant 0 : i32
    return %c0_i32, %c0_i32_0 : i32, i32
  }
  func.func @transform_10(%arg0: i32) -> (i32, i32) {
    %c0_i32 = arith.constant 0 : i32
    %c0_i32_0 = arith.constant 0 : i32
    %c0_i32_1 = arith.constant 0 : i32
    return %c0_i32, %c0_i32_0 : i32, i32
  }
  func.func @transform_11(%arg0: i32) -> (i32, i32, i32) {
    %c0_i32 = arith.constant 0 : i32
    %c0_i32_0 = arith.constant 0 : i32
    %c0_i32_1 = arith.constant 0 : i32
    return %arg0, %c0_i32, %c0_i32_0 : i32, i32, i32
  }
  func.func @transform_12(%arg0: i32) -> (i32, i32) {
    %c0_i32 = arith.constant 0 : i32
    %c0_i32_0 = arith.constant 0 : i32
    %c0_i32_1 = arith.constant 0 : i32
    return %c0_i32, %c0_i32_0 : i32, i32
  }
}

</mosaic_0001>

<llo_original>
// kernel: tpu_custom_call.1
$region0: #{tpu_custom_call.1}
  #allocation0 [shape = 'u32[]', space=smem, size = 0x4, offset = 0x4, fixed_abs, tag = 'smem constant byte address 0x4 - core index']
  #allocation1 [shape = 'u32[144,128]{1,0:T(1,128)}', space=vmem, size = 0x12000, scoped, tag = 'internal scratch']
  #allocation2 [shape = 'f32[1,128]{1,0:T(1,128)}', space=vmem, size = 0x200, scoped, tag = 'scratch operand']
  %s0 = inlined_call_operand.vmem [shape: f32[8,2], index: 0, kind: input, shape index: {}]
  %s1 = inlined_call_operand.vmem [shape: f32[1,128], index: 1, kind: input, shape index: {}]
  %s2 = inlined_call_operand.vmem [shape: f32[2,128], index: 2, kind: input, shape index: {}]
  %s3 = inlined_call_operand.vmem [shape: f32[1,128], index: 3, kind: input, shape index: {}]
  %s4 = inlined_call_operand.hbm [shape: bf16[128,256], index: 4, kind: input, shape index: {}]
  %s5 = inlined_call_operand.hbm [shape: bf16[128,256], index: 5, kind: input, shape index: {}]
  %s6 = inlined_call_operand.vmem [shape: f32[1,256], index: 6, kind: input, shape index: {}]
  %s7 = inlined_call_operand.hbm [shape: bf16[256,128], index: 7, kind: input, shape index: {}]
  %s8 = inlined_call_operand.vmem [shape: f32[1,128], index: 8, kind: input, shape index: {}]
  %s9 = inlined_call_operand.hbm [shape: bf16[128,384], index: 9, kind: input, shape index: {}]
  %s10 = inlined_call_operand.vmem [shape: f32[1,384], index: 10, kind: input, shape index: {}]
  %s11 = inlined_call_operand.hbm [shape: f32[8,1,256], index: 11, kind: output, shape index: {0}]
  %s12 = inlined_call_operand.hbm [shape: f32[1,128], index: 12, kind: output, shape index: {1}]
  %13 = xla_tuple %s11, %s12
  %s14 = sld [smem:[#allocation0]]
  $region109: #{tpu_custom_call.1} parent=0
    _
  %s16 = ssub.s32 1, %s14
  %s17 = scalar_select 0, %s16, %s14
  $region1: #{tpu_custom_call.1} parent=0
    #allocation3 [shape = 'u8[4096]{0}', space=smem, size = 0x1000, scoped, tag = 'input window, operand 0, single buffered']
    #allocation4 [shape = 's32[2]{0}', space=sflag, size = 0x8, scoped, tag = 'scoped memory for tpu_custom_call.1']
    #allocation5 [shape = 's32[2]{0}', space=sflag, size = 0x8, scoped, tag = 'scoped memory for tpu_custom_call.1']
    #allocation6 [shape = 's32[2]{0}', space=sflag, size = 0x8, scoped, tag = 'scoped memory for tpu_custom_call.1']
    #allocation7 [shape = 'u8[65536]{0}', space=vmem, size = 0x10000, scoped, tag = 'input window, operand 4, single buffered']
    #allocation8 [shape = 'u8[65536]{0}', space=vmem, size = 0x10000, scoped, tag = 'input window, operand 5, single buffered']
    #allocation9 [shape = 's32[1]{0}', space=sflag, size = 0x4, scoped, tag = 'scoped memory for tpu_custom_call.1']
    #allocation10 [shape = 'u8[65536]{0}', space=vmem, size = 0x10000, scoped, tag = 'input window, operand 7, single buffered']
    #allocation11 [shape = 'u8[98304]{0}', space=vmem, size = 0x18000, scoped, tag = 'input window, operand 9, single buffered']
    #allocation12 [shape = 's32[1]{0}', space=sflag, size = 0x4, scoped, tag = 'scoped memory for tpu_custom_call.1']
    #allocation13 [shape = 'u8[2048]{0}', space=vmem, size = 0x800, scoped, tag = 'output window, operand 0']
    #allocation14 [shape = 'u8[512]{0}', space=vmem, size = 0x400, scoped, tag = 'output window, operand 1, single buffered']
    #allocation15 [shape = 's32[1]{0}', space=sflag, size = 0x4, scoped, tag = 'scoped memory for tpu_custom_call.1']
    %18 = vsyncpa [#allocation6], 0
    %19 = vsyncpa [#allocation4], 0
    %20 = vsyncpa [#allocation9], 0
    %21 = vsyncpa [#allocation12], 0
    %22 = vsyncpa [#allocation5], 0
    %s23 = scalar_lea.sflag [#allocation5], 1
    %24 = vsyncpa %s23, 0
    %25 = vsyncpa [#allocation15], 0
    loop: start=0, step=1, limit=10
    $region2: #{tpu_custom_call.1} parent=1 // loop_pre_header
      _
    $region3: #{tpu_custom_call.1} parent=1 // loop_header
      %s27 = sphi 0, %s31
      %p28 = scmp.ge.s32.totalorder %s27, 10
      %s35 = sphi 0, %s35
      %s37 = sphi 0, %s35
      %s38 = sphi 0, %s37
      %s52 = sphi 0, %s38
      %s56 = sphi 0, %s56
      %s58 = sphi 0, %s56
      %s59 = sphi 0, %s58
      %s73 = sphi 0, %s59
      %s77 = sphi 0, %s77
      %s79 = sphi 0, %s77
      %s80 = sphi 0, %s79
      %s94 = sphi 0, %s80
      %s98 = sphi 0, %s98
      %s100 = sphi 0, %s98
      %s101 = sphi 0, %s100
      %s115 = sphi 0, %s101
      %s119 = sphi 0, %s119
      %s121 = sphi 0, %s119
      %s122 = sphi 0, %s121
      %s136 = sphi 0, %s122
      %s140 = sphi 0, %s140
      %s142 = sphi 0, %s140
      %s143 = sphi 0, %s142
      %s157 = sphi 0, %s143
      %s161 = sphi 0, %s161
      %s163 = sphi 0, %s161
      %s164 = sphi 0, %s163
      %s178 = sphi 0, %s164
      %s182 = sphi 0, %s182
      %s184 = sphi 0, %s182
      %s185 = sphi 0, %s184
      %s199 = sphi 0, %s185
      %s203 = sphi 0, %s203
      %s205 = sphi 0, %s203
      %s206 = sphi 0, %s205
      %s220 = sphi 0, %s206
      %s224 = sphi 0, %s224
      %s226 = sphi 0, %s224
      %s227 = sphi 0, %s226
      %s241 = sphi 0, %s227
      %s245 = sphi 0, %s245
      %s247 = sphi 0, %s245
      %s248 = sphi 0, %s247
      %s262 = sphi 0, %s248
      %s268 = sphi 0, %s270
      %s271 = sphi 0, %s268
      %s272 = sphi 0, %s271
      %s288 = sphi 0, %s272
      %s292 = sphi 0, %s292
      %s294 = sphi 0, %s292
      %s295 = sphi 0, %s294
      %s309 = sphi 0, %s295
    $region4: #{tpu_custom_call.1} parent=1 // loop_header_branch
      %30 = sbr.rel (%p28) target = $region8
    $region5: #{tpu_custom_call.1} parent=1 // loop_body
      %s32 = ssub.s32 %s27, 1
      %s33 = ssub.s32 %s27, 2
      %s34 = sadd.s32 %s27, 1
      %s36 = sadd.s32 %s35, 1
      %p39 = scmp.eq.s32.totalorder %s27, 7
      %p40 = scmp.ne.s32.totalorder %s35, %s37
      %p41 = scmp.eq.s32.totalorder %s27, 0
      %p42 = por %p40, %p41
      %p43 = scmp.ne.s32.totalorder %s35, %s37
      %p44 = scmp.eq.s32.totalorder %s32, 7
      %p45 = por %p43, %p44
      %p46 = scmp.ne.s32.totalorder %s37, %s38
      %p47 = scmp.eq.s32.totalorder %s32, 0
      %p48 = por %p46, %p47
      %p49 = scmp.ne.s32.totalorder %s37, %s38
      %p50 = scmp.eq.s32.totalorder %s33, 7
      %p51 = por %p49, %p50
      %p53 = scmp.ne.s32.totalorder %s38, %s52
      %p54 = scmp.eq.s32.totalorder %s33, 0
      %p55 = por %p53, %p54
      %s57 = sadd.s32 %s56, 1
      %p60 = scmp.eq.s32.totalorder %s27, 7
      %p61 = scmp.ne.s32.totalorder %s56, %s58
      %p62 = scmp.eq.s32.totalorder %s27, 0
      %p63 = por %p61, %p62
      %p64 = scmp.ne.s32.totalorder %s56, %s58
      %p65 = scmp.eq.s32.totalorder %s32, 7
      %p66 = por %p64, %p65
      %p67 = scmp.ne.s32.totalorder %s58, %s59
      %p68 = scmp.eq.s32.totalorder %s32, 0
      %p69 = por %p67, %p68
      %p70 = scmp.ne.s32.totalorder %s58, %s59
      %p71 = scmp.eq.s32.totalorder %s33, 7
      %p72 = por %p70, %p71
      %p74 = scmp.ne.s32.totalorder %s59, %s73
      %p75 = scmp.eq.s32.totalorder %s33, 0
      %p76 = por %p74, %p75
      %s78 = sadd.s32 %s77, 1
      %p81 = scmp.eq.s32.totalorder %s27, 7
      %p82 = scmp.ne.s32.totalorder %s77, %s79
      %p83 = scmp.eq.s32.totalorder %s27, 0
      %p84 = por %p82, %p83
      %p85 = scmp.ne.s32.totalorder %s77, %s79
      %p86 = scmp.eq.s32.totalorder %s32, 7
      %p87 = por %p85, %p86
      %p88 = scmp.ne.s32.totalorder %s79, %s80
      %p89 = scmp.eq.s32.totalorder %s32, 0
      %p90 = por %p88, %p89
      %p91 = scmp.ne.s32.totalorder %s79, %s80
      %p92 = scmp.eq.s32.totalorder %s33, 7
      %p93 = por %p91, %p92
      %p95 = scmp.ne.s32.totalorder %s80, %s94
      %p96 = scmp.eq.s32.totalorder %s33, 0
      %p97 = por %p95, %p96
      %s99 = sadd.s32 %s98, 1
      %p102 = scmp.eq.s32.totalorder %s27, 7
      %p103 = scmp.ne.s32.totalorder %s98, %s100
      %p104 = scmp.eq.s32.totalorder %s27, 0
      %p105 = por %p103, %p104
      %p106 = scmp.ne.s32.totalorder %s98, %s100
      %p107 = scmp.eq.s32.totalorder %s32, 7
      %p108 = por %p106, %p107
      %p109 = scmp.ne.s32.totalorder %s100, %s101
      %p110 = scmp.eq.s32.totalorder %s32, 0
      %p111 = por %p109, %p110
      %p112 = scmp.ne.s32.totalorder %s100, %s101
      %p113 = scmp.eq.s32.totalorder %s33, 7
      %p114 = por %p112, %p113
      %p116 = scmp.ne.s32.totalorder %s101, %s115
      %p117 = scmp.eq.s32.totalorder %s33, 0
      %p118 = por %p116, %p117
      %s120 = sadd.s32 %s119, 1
      %p123 = scmp.eq.s32.totalorder %s27, 7
      %p124 = scmp.ne.s32.totalorder %s119, %s121
      %p125 = scmp.eq.s32.totalorder %s27, 0
      %p126 = por %p124, %p125
      %p127 = scmp.ne.s32.totalorder %s119, %s121
      %p128 = scmp.eq.s32.totalorder %s32, 7
      %p129 = por %p127, %p128
      %p130 = scmp.ne.s32.totalorder %s121, %s122
      %p131 = scmp.eq.s32.totalorder %s32, 0
      %p132 = por %p130, %p131
      %p133 = scmp.ne.s32.totalorder %s121, %s122
      %p134 = scmp.eq.s32.totalorder %s33, 7
      %p135 = por %p133, %p134
      %p137 = scmp.ne.s32.totalorder %s122, %s136
      %p138 = scmp.eq.s32.totalorder %s33, 0
      %p139 = por %p137, %p138
      %s141 = sadd.s32 %s140, 1
      %p144 = scmp.eq.s32.totalorder %s27, 7
      %p145 = scmp.ne.s32.totalorder %s140, %s142
      %p146 = scmp.eq.s32.totalorder %s27, 0
      %p147 = por %p145, %p146
      %p148 = scmp.ne.s32.totalorder %s140, %s142
      %p149 = scmp.eq.s32.totalorder %s32, 7
      %p150 = por %p148, %p149
      %p151 = scmp.ne.s32.totalorder %s142, %s143
      %p152 = scmp.eq.s32.totalorder %s32, 0
      %p153 = por %p151, %p152
      %p154 = scmp.ne.s32.totalorder %s142, %s143
      %p155 = scmp.eq.s32.totalorder %s33, 7
      %p156 = por %p154, %p155
      %p158 = scmp.ne.s32.totalorder %s143, %s157
      %p159 = scmp.eq.s32.totalorder %s33, 0
      %p160 = por %p158, %p159
      %s162 = sadd.s32 %s161, 1
      %p165 = scmp.eq.s32.totalorder %s27, 7
      %p166 = scmp.ne.s32.totalorder %s161, %s163
      %p167 = scmp.eq.s32.totalorder %s27, 0
      %p168 = por %p166, %p167
      %p169 = scmp.ne.s32.totalorder %s161, %s163
      %p170 = scmp.eq.s32.totalorder %s32, 7
      %p171 = por %p169, %p170
      %p172 = scmp.ne.s32.totalorder %s163, %s164
      %p173 = scmp.eq.s32.totalorder %s32, 0
      %p174 = por %p172, %p173
      %p175 = scmp.ne.s32.totalorder %s163, %s164
      %p176 = scmp.eq.s32.totalorder %s33, 7
      %p177 = por %p175, %p176
      %p179 = scmp.ne.s32.totalorder %s164, %s178
      %p180 = scmp.eq.s32.totalorder %s33, 0
      %p181 = por %p179, %p180
      %s183 = sadd.s32 %s182, 1
      %p186 = scmp.eq.s32.totalorder %s27, 7
      %p187 = scmp.ne.s32.totalorder %s182, %s184
      %p188 = scmp.eq.s32.totalorder %s27, 0
      %p189 = por %p187, %p188
      %p190 = scmp.ne.s32.totalorder %s182, %s184
      %p191 = scmp.eq.s32.totalorder %s32, 7
      %p192 = por %p190, %p191
      %p193 = scmp.ne.s32.totalorder %s184, %s185
      %p194 = scmp.eq.s32.totalorder %s32, 0
      %p195 = por %p193, %p194
      %p196 = scmp.ne.s32.totalorder %s184, %s185
      %p197 = scmp.eq.s32.totalorder %s33, 7
      %p198 = por %p196, %p197
      %p200 = scmp.ne.s32.totalorder %s185, %s199
      %p201 = scmp.eq.s32.totalorder %s33, 0
      %p202 = por %p200, %p201
      %s204 = sadd.s32 %s203, 1
      %p207 = scmp.eq.s32.totalorder %s27, 7
      %p208 = scmp.ne.s32.totalorder %s203, %s205
      %p209 = scmp.eq.s32.totalorder %s27, 0
      %p210 = por %p208, %p209
      %p211 = scmp.ne.s32.totalorder %s203, %s205
      %p212 = scmp.eq.s32.totalorder %s32, 7
      %p213 = por %p211, %p212
      %p214 = scmp.ne.s32.totalorder %s205, %s206
      %p215 = scmp.eq.s32.totalorder %s32, 0
      %p216 = por %p214, %p215
      %p217 = scmp.ne.s32.totalorder %s205, %s206
      %p218 = scmp.eq.s32.totalorder %s33, 7
      %p219 = por %p217, %p218
      %p221 = scmp.ne.s32.totalorder %s206, %s220
      %p222 = scmp.eq.s32.totalorder %s33, 0
      %p223 = por %p221, %p222
      %s225 = sadd.s32 %s224, 1
      %p228 = scmp.eq.s32.totalorder %s27, 7
      %p229 = scmp.ne.s32.totalorder %s224, %s226
      %p230 = scmp.eq.s32.totalorder %s27, 0
      %p231 = por %p229, %p230
      %p232 = scmp.ne.s32.totalorder %s224, %s226
      %p233 = scmp.eq.s32.totalorder %s32, 7
      %p234 = por %p232, %p233
      %p235 = scmp.ne.s32.totalorder %s226, %s227
      %p236 = scmp.eq.s32.totalorder %s32, 0
      %p237 = por %p235, %p236
      %p238 = scmp.ne.s32.totalorder %s226, %s227
      %p239 = scmp.eq.s32.totalorder %s33, 7
      %p240 = por %p238, %p239
      %p242 = scmp.ne.s32.totalorder %s227, %s241
      %p243 = scmp.eq.s32.totalorder %s33, 0
      %p244 = por %p242, %p243
      %s246 = sadd.s32 %s245, 1
      %p249 = scmp.eq.s32.totalorder %s27, 7
      %p250 = scmp.ne.s32.totalorder %s245, %s247
      %p251 = scmp.eq.s32.totalorder %s27, 0
      %p252 = por %p250, %p251
      %p253 = scmp.ne.s32.totalorder %s245, %s247
      %p254 = scmp.eq.s32.totalorder %s32, 7
      %p255 = por %p253, %p254
      %p256 = scmp.ne.s32.totalorder %s247, %s248
      %p257 = scmp.eq.s32.totalorder %s32, 0
      %p258 = por %p256, %p257
      %p259 = scmp.ne.s32.totalorder %s247, %s248
      %p260 = scmp.eq.s32.totalorder %s33, 7
      %p261 = por %p259, %p260
      %p263 = scmp.ne.s32.totalorder %s248, %s262
      %p264 = scmp.eq.s32.totalorder %s33, 0
      %p265 = por %p263, %p264
      %s266 = ssub.s32 %s27, %s34
      %p267 = scmp.eq.s32.totalorder %s266, 0
      %s269 = sadd.s32 %s268, 1
      %s270 = scalar_select %p267, %s268, %s269
      %p273 = pneg %p267
      %p274 = scmp.eq.s32.totalorder %s27, 7
      %p275 = por %p273, %p274
      %p276 = scmp.ne.s32.totalorder %s268, %s271
      %p277 = scmp.eq.s32.totalorder %s27, 0
      %p278 = por %p276, %p277
      %p279 = scmp.ne.s32.totalorder %s268, %s271
      %p280 = scmp.eq.s32.totalorder %s32, 7
      %p281 = por %p279, %p280
      %p282 = scmp.ne.s32.totalorder %s271, %s272
      %p283 = scmp.eq.s32.totalorder %s32, 0
      %p284 = por %p282, %p283
      %p285 = scmp.ne.s32.totalorder %s271, %s272
      %p286 = scmp.eq.s32.totalorder %s33, 7
      %p287 = por %p285, %p286
      %p289 = scmp.ne.s32.totalorder %s272, %s288
      %p290 = scmp.eq.s32.totalorder %s33, 0
      %p291 = por %p289, %p290
      %s293 = sadd.s32 %s292, 1
      %p296 = scmp.eq.s32.totalorder %s27, 7
      %p297 = scmp.ne.s32.totalorder %s292, %s294
      %p298 = scmp.eq.s32.totalorder %s27, 0
      %p299 = por %p297, %p298
      %p300 = scmp.ne.s32.totalorder %s292, %s294
      %p301 = scmp.eq.s32.totalorder %s32, 7
      %p302 = por %p300, %p301
      %p303 = scmp.ne.s32.totalorder %s294, %s295
      %p304 = scmp.eq.s32.totalorder %s32, 0
      %p305 = por %p303, %p304
      %p306 = scmp.ne.s32.totalorder %s294, %s295
      %p307 = scmp.eq.s32.totalorder %s33, 7
      %p308 = por %p306, %p307
      %p310 = scmp.ne.s32.totalorder %s295, %s309
      %p311 = scmp.eq.s32.totalorder %s33, 0
      %p312 = por %p310, %p311
      %p313 = scmp.le.s32.totalorder 1, %s27
      %p314 = scmp.lt.s32.totalorder %s27, 9
      %p315 = pnand %p313, %p314
      %p316 = pneg %p315
      // Predicated region
      $region9: #{tpu_custom_call.1} parent=5 // pred_check
        _
      $region10: #{tpu_custom_call.1} parent=5 // pred_check_branch
        %318 = sbr.rel (%p315) target = $region12
      $region11: #{tpu_custom_call.1} parent=5 // pred_region
        %s319 = ssub.s32 %s27, 1
        // Predicated region
        $region13: #{tpu_custom_call.1} parent=11 // pred_check
          %p320 = pneg %p48
        $region14: #{tpu_custom_call.1} parent=11 // pred_check_branch
          %322 = sbr.rel (%p320) target = $region16
        $region15: #{tpu_custom_call.1} parent=11 // pred_region
          %s324 = ssub.s32 128, 128
          %325 = vsyncadd [#allocation6], %s324
          %s327 = sshll.u32 %s0, 4
          %s328 = int_to_ptr.vmem [resolvable:$true] %s327
          %330 = dma.vmem_to_smem %s328, 128, [#allocation3], [#allocation6]
        $region16: #{tpu_custom_call.1} parent=11 // pred_fallthru
          _
        // Predicated region
        $region17: #{tpu_custom_call.1} parent=11 // pred_check
          %p331 = pneg %p69
        $region18: #{tpu_custom_call.1} parent=11 // pred_check_branch
          %333 = sbr.rel (%p331) target = $region20
        $region19: #{tpu_custom_call.1} parent=11 // pred_region
          _
        $region20: #{tpu_custom_call.1} parent=11 // pred_fallthru
          _
        // Predicated region
        $region21: #{tpu_custom_call.1} parent=11 // pred_check
          %p334 = pneg %p90
        $region22: #{tpu_custom_call.1} parent=11 // pred_check_branch
          %336 = sbr.rel (%p334) target = $region24
        $region23: #{tpu_custom_call.1} parent=11 // pred_region
          _
        $region24: #{tpu_custom_call.1} parent=11 // pred_fallthru
          _
        // Predicated region
        $region25: #{tpu_custom_call.1} parent=11 // pred_check
          %p337 = pneg %p111
        $region26: #{tpu_custom_call.1} parent=11 // pred_check_branch
          %339 = sbr.rel (%p337) target = $region28
        $region27: #{tpu_custom_call.1} parent=11 // pred_region
          _
        $region28: #{tpu_custom_call.1} parent=11 // pred_fallthru
          _
        // Predicated region
        $region29: #{tpu_custom_call.1} parent=11 // pred_check
          %p340 = pneg %p132
        $region30: #{tpu_custom_call.1} parent=11 // pred_check_branch
          %342 = sbr.rel (%p340) target = $region32
        $region31: #{tpu_custom_call.1} parent=11 // pred_region
          %s344 = ssub.s32 2048, 2048
          %345 = vsyncadd [#allocation4], %s344
          %s346 = sshll.u32 [#allocation7], 4
          %s347 = int_to_ptr.vmem [resolvable:$true] %s346
          %352 = dma.hbm_to_vmem [thread:$0]  %s4, 2048, %s347, [#allocation4], 128, 128, 8
        $region32: #{tpu_custom_call.1} parent=11 // pred_fallthru
          _
        // Predicated region
        $region33: #{tpu_custom_call.1} parent=11 // pred_check
          %p353 = pneg %p153
        $region34: #{tpu_custom_call.1} parent=11 // pred_check_branch
          %355 = sbr.rel (%p353) target = $region36
        $region35: #{tpu_custom_call.1} parent=11 // pred_region
          %s357 = ssub.s32 2048, 2048
          %358 = vsyncadd [#allocation9], %s357
          %s359 = sshll.u32 [#allocation8], 4
          %s360 = int_to_ptr.vmem [resolvable:$true] %s359
          %365 = dma.hbm_to_vmem [thread:$0]  %s5, 2048, %s360, [#allocation9], 128, 128, 8
        $region36: #{tpu_custom_call.1} parent=11 // pred_fallthru
          _
        // Predicated region
        $region37: #{tpu_custom_call.1} parent=11 // pred_check
          %p366 = pneg %p174
        $region38: #{tpu_custom_call.1} parent=11 // pred_check_branch
          %368 = sbr.rel (%p366) target = $region40
        $region39: #{tpu_custom_call.1} parent=11 // pred_region
          _
        $region40: #{tpu_custom_call.1} parent=11 // pred_fallthru
          _
        // Predicated region
        $region41: #{tpu_custom_call.1} parent=11 // pred_check
          %p369 = pneg %p195
        $region42: #{tpu_custom_call.1} parent=11 // pred_check_branch
          %371 = sbr.rel (%p369) target = $region44
        $region43: #{tpu_custom_call.1} parent=11 // pred_region
          %s373 = ssub.s32 2048, 2048
          %374 = vsyncadd [#allocation9], %s373
          %s375 = sshll.u32 [#allocation10], 4
          %s376 = int_to_ptr.vmem [resolvable:$true] %s375
          %381 = dma.hbm_to_vmem [thread:$0]  %s7, 2048, %s376, [#allocation9], 64, 64, 4
        $region44: #{tpu_custom_call.1} parent=11 // pred_fallthru
          _
        // Predicated region
        $region45: #{tpu_custom_call.1} parent=11 // pred_check
          %p382 = pneg %p216
        $region46: #{tpu_custom_call.1} parent=11 // pred_check_branch
          %384 = sbr.rel (%p382) target = $region48
        $region47: #{tpu_custom_call.1} parent=11 // pred_region
          _
        $region48: #{tpu_custom_call.1} parent=11 // pred_fallthru
          _
        // Predicated region
        $region49: #{tpu_custom_call.1} parent=11 // pred_check
          %p385 = pneg %p237
        $region50: #{tpu_custom_call.1} parent=11 // pred_check_branch
          %387 = sbr.rel (%p385) target = $region52
        $region51: #{tpu_custom_call.1} parent=11 // pred_region
          %s389 = ssub.s32 3072, 3072
          %390 = vsyncadd [#allocation12], %s389
          %s391 = sshll.u32 [#allocation11], 4
          %s392 = int_to_ptr.vmem [resolvable:$true] %s391
          %397 = dma.hbm_to_vmem [thread:$0]  %s9, 3072, %s392, [#allocation12], 192, 192, 12
        $region52: #{tpu_custom_call.1} parent=11 // pred_fallthru
          _
        // Predicated region
        $region53: #{tpu_custom_call.1} parent=11 // pred_check
          %p398 = pneg %p258
        $region54: #{tpu_custom_call.1} parent=11 // pred_check_branch
          %400 = sbr.rel (%p398) target = $region56
        $region55: #{tpu_custom_call.1} parent=11 // pred_region
          _
        $region56: #{tpu_custom_call.1} parent=11 // pred_fallthru
          _
      $region12: #{tpu_custom_call.1} parent=5 // pred_fallthru
        _
      %p401 = scmp.lt.s32.totalorder %s27, 8
      // Predicated region
      $region57: #{tpu_custom_call.1} parent=5 // pred_check
        %p402 = pneg %p401
      $region58: #{tpu_custom_call.1} parent=5 // pred_check_branch
        %404 = sbr.rel (%p402) target = $region60
      $region59: #{tpu_custom_call.1} parent=5 // pred_region
        _
      $region60: #{tpu_custom_call.1} parent=5 // pred_fallthru
        _
      %p405 = scmp.le.s32.totalorder 1, %s27
      %p406 = scmp.lt.s32.totalorder %s27, 9
      %p407 = pnand %p405, %p406
      %p408 = pneg %p407
      // Predicated region
      $region61: #{tpu_custom_call.1} parent=5 // pred_check
        _
      $region62: #{tpu_custom_call.1} parent=5 // pred_check_branch
        %410 = sbr.rel (%p407) target = $region64
      $region63: #{tpu_custom_call.1} parent=5 // pred_region
        %s411 = ssub.s32 %s27, 1
        // Predicated region
        $region65: #{tpu_custom_call.1} parent=63 // pred_check
          %p412 = pneg %p48
        $region66: #{tpu_custom_call.1} parent=63 // pred_check_branch
          %414 = sbr.rel (%p412) target = $region68
        $region67: #{tpu_custom_call.1} parent=63 // pred_region
          %415 = dma.done [#allocation6], 128
        $region68: #{tpu_custom_call.1} parent=63 // pred_fallthru
          _
        // Predicated region
        $region69: #{tpu_custom_call.1} parent=63 // pred_check
          %p416 = pneg %p132
        $region70: #{tpu_custom_call.1} parent=63 // pred_check_branch
          %418 = sbr.rel (%p416) target = $region72
        $region71: #{tpu_custom_call.1} parent=63 // pred_region
          %419 = dma.done [#allocation4], 2048
        $region72: #{tpu_custom_call.1} parent=63 // pred_fallthru
          _
        // Predicated region
        $region73: #{tpu_custom_call.1} parent=63 // pred_check
          %p420 = pneg %p153
        $region74: #{tpu_custom_call.1} parent=63 // pred_check_branch
          %422 = sbr.rel (%p420) target = $region76
        $region75: #{tpu_custom_call.1} parent=63 // pred_region
          %423 = dma.done [#allocation9], 2048
        $region76: #{tpu_custom_call.1} parent=63 // pred_fallthru
          _
        // Predicated region
        $region77: #{tpu_custom_call.1} parent=63 // pred_check
          %p424 = pneg %p195
        $region78: #{tpu_custom_call.1} parent=63 // pred_check_branch
          %426 = sbr.rel (%p424) target = $region80
        $region79: #{tpu_custom_call.1} parent=63 // pred_region
          %427 = dma.done [#allocation9], 2048
        $region80: #{tpu_custom_call.1} parent=63 // pred_fallthru
          _
        // Predicated region
        $region81: #{tpu_custom_call.1} parent=63 // pred_check
          %p428 = pneg %p237
        $region82: #{tpu_custom_call.1} parent=63 // pred_check_branch
          %430 = sbr.rel (%p428) target = $region84
        $region83: #{tpu_custom_call.1} parent=63 // pred_region
          %431 = dma.done [#allocation12], 3072
        $region84: #{tpu_custom_call.1} parent=63 // pred_fallthru
          _
        %432 = sfence
        %p433 = pneg %p48
        %p434 = pneg %p45
        %p435 = pneg %p69
        %p436 = pneg %p66
        %p437 = pneg %p90
        %p438 = pneg %p87
        %p439 = pneg %p111
        %p440 = pneg %p108
        %p441 = pneg %p132
        %p442 = pneg %p129
        %p443 = pneg %p153
        %p444 = pneg %p150
        %p445 = pneg %p174
        %p446 = pneg %p171
        %p447 = pneg %p195
        %p448 = pneg %p192
        %p449 = pneg %p216
        %p450 = pneg %p213
        %p451 = pneg %p237
        %p452 = pneg %p234
        %p453 = pneg %p258
        %p454 = pneg %p255
        %p455 = pneg %p284
        %p456 = pneg %p281
        %s457 = sand.u32 %s271, 1
        %s458 = scalar_lea.sflag [#allocation5], %s457
        %s459 = sand.u32 %s271, 1
        %s460 = smul.addr %s459, 2
        %s461 = scalar_lea.vmem [#allocation13], %s460
        %p462 = pneg %p305
        %p463 = pneg %p302
        %p465 = scmp.eq.s32.totalorder %s32, 0
        // Predicated region
        $region85: #{tpu_custom_call.1} parent=63 // pred_check
          %p466 = pneg %p465
        $region86: #{tpu_custom_call.1} parent=63 // pred_check_branch
          %468 = sbr.rel (%p466) target = $region88
        $region87: #{tpu_custom_call.1} parent=63 // pred_region
          %v469 = vld [vmem:[%s1] sm:$0x1]
          %470 = vst [vmem:[#allocation2] sm:$0x1] %v469
        $region88: #{tpu_custom_call.1} parent=63 // pred_fallthru
          _
        %s471 = smul.u32 %s32, 128
        %s472 = sld [smem:[#allocation3 + %s471]]
        %s473 = sadd.s32 %s471, 1
        %s474 = sld [smem:[#allocation3 + %s473]]
        %v475 = vld [vmem:[%s2] sm:$0x1]
        %v476 = vstv %s472
        %v477 = vmul.f32 %v476, %v475
        %v478 = vld [vmem:[%s2 + $0x1] sm:$0x1]
        %v479 = vstv %s474
        %v480 = vmul.f32 %v479, %v478
        %v481 = vadd.f32 %v477, %v480
        %v482 = vld [vmem:[%s3] sm:$0x1]
        %v483 = vadd.f32 %v481, %v482
        %v484 = vld [vmem:[#allocation2] sm:$0x1]
        %v485 = vpack.c.bf16 %v483, %v483
        %v486 = vld [vmem:[#allocation7] sm:$0xff]
        %v487 = vld [vmem:[#allocation7 + $0x8] sm:$0xff]
        %v488 = vld [vmem:[#allocation7 + $0x10] sm:$0xff]
        %v489 = vld [vmem:[#allocation7 + $0x18] sm:$0xff]
        %v490 = vld [vmem:[#allocation7 + $0x20] sm:$0xff]
        %v491 = vld [vmem:[#allocation7 + $0x28] sm:$0xff]
        %v492 = vld [vmem:[#allocation7 + $0x30] sm:$0xff]
        %v493 = vld [vmem:[#allocation7 + $0x38] sm:$0xff]
        %v494 = vld [vmem:[#allocation7 + $0x40] sm:$0xff]
        %v495 = vld [vmem:[#allocation7 + $0x48] sm:$0xff]
        %v496 = vld [vmem:[#allocation7 + $0x50] sm:$0xff]
        %v497 = vld [vmem:[#allocation7 + $0x58] sm:$0xff]
        %v498 = vld [vmem:[#allocation7 + $0x60] sm:$0xff]
        %v499 = vld [vmem:[#allocation7 + $0x68] sm:$0xff]
        %v500 = vld [vmem:[#allocation7 + $0x70] sm:$0xff]
        %v501 = vld [vmem:[#allocation7 + $0x78] sm:$0xff]
        %v502 = vpack.c.bf16 %v484, %v484
        %v503 = vld [vmem:[#allocation8] sm:$0xff]
        %v504 = vld [vmem:[#allocation8 + $0x8] sm:$0xff]
        %v505 = vld [vmem:[#allocation8 + $0x10] sm:$0xff]
        %v506 = vld [vmem:[#allocation8 + $0x18] sm:$0xff]
        %v507 = vld [vmem:[#allocation8 + $0x20] sm:$0xff]
        %v508 = vld [vmem:[#allocation8 + $0x28] sm:$0xff]
        %v509 = vld [vmem:[#allocation8 + $0x30] sm:$0xff]
        %v510 = vld [vmem:[#allocation8 + $0x38] sm:$0xff]
        %v511 = vld [vmem:[#allocation8 + $0x40] sm:$0xff]
        %v512 = vld [vmem:[#allocation8 + $0x48] sm:$0xff]
        %v513 = vld [vmem:[#allocation8 + $0x50] sm:$0xff]
        %v514 = vld [vmem:[#allocation8 + $0x58] sm:$0xff]
        %v515 = vld [vmem:[#allocation8 + $0x60] sm:$0xff]
        %v516 = vld [vmem:[#allocation8 + $0x68] sm:$0xff]
        %v517 = vld [vmem:[#allocation8 + $0x70] sm:$0xff]
        %v518 = vld [vmem:[#allocation8 + $0x78] sm:$0xff]
        %v535 = vunpack.c.l.b16 %v503
        %v536 = vunpack.c.h.b16 %v503
        %v537 = vunpack.c.l.b16 %v504
        %v538 = vunpack.c.h.b16 %v504
        %v539 = vunpack.c.l.b16 %v505
        %v540 = vunpack.c.h.b16 %v505
        %v541 = vunpack.c.l.b16 %v506
        %v542 = vunpack.c.h.b16 %v506
        %v543 = vunpack.c.l.b16 %v507
        %v544 = vunpack.c.h.b16 %v507
        %v545 = vunpack.c.l.b16 %v508
        %v546 = vunpack.c.h.b16 %v508
        %v547 = vunpack.c.l.b16 %v509
        %v548 = vunpack.c.h.b16 %v509
        %v549 = vunpack.c.l.b16 %v510
        %v550 = vunpack.c.h.b16 %v510
        %v551 = vunpack.c.l.b16 %v511
        %v552 = vunpack.c.h.b16 %v511
        %v553 = vunpack.c.l.b16 %v512
        %v554 = vunpack.c.h.b16 %v512
        %v555 = vunpack.c.l.b16 %v513
        %v556 = vunpack.c.h.b16 %v513
        %v557 = vunpack.c.l.b16 %v514
        %v558 = vunpack.c.h.b16 %v514
        %v559 = vunpack.c.l.b16 %v515
        %v560 = vunpack.c.h.b16 %v515
        %v561 = vunpack.c.l.b16 %v516
        %v562 = vunpack.c.h.b16 %v516
        %v563 = vunpack.c.l.b16 %v517
        %v564 = vunpack.c.h.b16 %v517
        %v565 = vunpack.c.l.b16 %v518
        %v566 = vunpack.c.h.b16 %v518
        %v567 = vpack.c.b16 %v537, %v535
        %v568 = vpack.c.b16 %v538, %v536
        %v569 = vpack.c.b16 %v541, %v539
        %v570 = vpack.c.b16 %v542, %v540
        %v571 = vpack.c.b16 %v545, %v543
        %v572 = vpack.c.b16 %v546, %v544
        %v573 = vpack.c.b16 %v549, %v547
        %v574 = vpack.c.b16 %v550, %v548
        %v575 = vpack.c.b16 %v553, %v551
        %v576 = vpack.c.b16 %v554, %v552
        %v577 = vpack.c.b16 %v557, %v555
        %v578 = vpack.c.b16 %v558, %v556
        %v579 = vpack.c.b16 %v561, %v559
        %v580 = vpack.c.b16 %v562, %v560
        %v581 = vpack.c.b16 %v565, %v563
        %v582 = vpack.c.b16 %v566, %v564
        %599 = vmatprep.subr.bf16.mxu0 %v568
        %600 = vmatpush1.bf16.msra.mxu0 %v567
        %601 = vmatprep.subr.bf16.mxu0 %v570
        %602 = vmatpush1.bf16.msra.mxu0 %v569
        %603 = vmatprep.subr.bf16.mxu0 %v572
        %604 = vmatpush1.bf16.msra.mxu0 %v571
        %605 = vmatprep.subr.bf16.mxu0 %v574
        %606 = vmatpush1.bf16.msra.mxu0 %v573
        %607 = vmatprep.subr.bf16.mxu0 %v576
        %608 = vmatpush1.bf16.msra.mxu0 %v575
        %609 = vmatprep.subr.bf16.mxu0 %v578
        %610 = vmatpush1.bf16.msra.mxu0 %v577
        %611 = vmatprep.subr.bf16.mxu0 %v580
        %612 = vmatpush1.bf16.msra.mxu0 %v579
        %613 = vmatprep.subr.bf16.mxu0 %v582
        %614 = vmatpush1.bf16.msra.mxu0 %v581
        %615 = vmatprep.subr.bf16.mxu0 0
        %616 = vmatpush1.bf16.msra.mxu0 0
        %617 = vmatprep.subr.bf16.mxu0 0
        %618 = vmatpush1.bf16.msra.mxu0 0
        %619 = vmatprep.subr.bf16.mxu0 0
        %620 = vmatpush1.bf16.msra.mxu0 0
        %621 = vmatprep.subr.bf16.mxu0 0
        %622 = vmatpush1.bf16.msra.mxu0 0
        %623 = vmatprep.subr.bf16.mxu0 0
        %624 = vmatpush1.bf16.msra.mxu0 0
        %625 = vmatprep.subr.bf16.mxu0 0
        %626 = vmatpush1.bf16.msra.mxu0 0
        %627 = vmatprep.subr.bf16.mxu0 0
        %628 = vmatpush1.bf16.msra.mxu0 0
        %629 = vmatprep.subr.bf16.mxu0 0
        %630 = vmatpush1.bf16.msra.mxu0 0
        %631 = vmatprep.mubr.bf16.mxu0 0
        %632 = vmatmul.mubr.bf16.gmra.mrb[0].mxu0 %v502
        %v633 = vpop.f32.mrb[0].mxu0
        %v634 = vadd.f32 0.0, %v633
        %v635 = vpop.f32.mrb[0].mxu0
        %v636 = vadd.f32 0.0, %v635
        %v637 = vpop.f32.mrb[0].mxu0
        %v638 = vpop.f32.mrb[0].mxu0
        %639 = vdwg.mxu0
        %v656 = vunpack.c.l.b16 %v486
        %v657 = vunpack.c.h.b16 %v486
        %v658 = vunpack.c.l.b16 %v487
        %v659 = vunpack.c.h.b16 %v487
        %v660 = vunpack.c.l.b16 %v488
        %v661 = vunpack.c.h.b16 %v488
        %v662 = vunpack.c.l.b16 %v489
        %v663 = vunpack.c.h.b16 %v489
        %v664 = vunpack.c.l.b16 %v490
        %v665 = vunpack.c.h.b16 %v490
        %v666 = vunpack.c.l.b16 %v491
        %v667 = vunpack.c.h.b16 %v491
        %v668 = vunpack.c.l.b16 %v492
        %v669 = vunpack.c.h.b16 %v492
        %v670 = vunpack.c.l.b16 %v493
        %v671 = vunpack.c.h.b16 %v493
        %v672 = vunpack.c.l.b16 %v494
        %v673 = vunpack.c.h.b16 %v494
        %v674 = vunpack.c.l.b16 %v495
        %v675 = vunpack.c.h.b16 %v495
        %v676 = vunpack.c.l.b16 %v496
        %v677 = vunpack.c.h.b16 %v496
        %v678 = vunpack.c.l.b16 %v497
        %v679 = vunpack.c.h.b16 %v497
        %v680 = vunpack.c.l.b16 %v498
        %v681 = vunpack.c.h.b16 %v498
        %v682 = vunpack.c.l.b16 %v499
        %v683 = vunpack.c.h.b16 %v499
        %v684 = vunpack.c.l.b16 %v500
        %v685 = vunpack.c.h.b16 %v500
        %v686 = vunpack.c.l.b16 %v501
        %v687 = vunpack.c.h.b16 %v501
        %v688 = vpack.c.b16 %v658, %v656
        %v689 = vpack.c.b16 %v659, %v657
        %v690 = vpack.c.b16 %v662, %v660
        %v691 = vpack.c.b16 %v663, %v661
        %v692 = vpack.c.b16 %v666, %v664
        %v693 = vpack.c.b16 %v667, %v665
        %v694 = vpack.c.b16 %v670, %v668
        %v695 = vpack.c.b16 %v671, %v669
        %v696 = vpack.c.b16 %v674, %v672
        %v697 = vpack.c.b16 %v675, %v673
        %v698 = vpack.c.b16 %v678, %v676
        %v699 = vpack.c.b16 %v679, %v677
        %v700 = vpack.c.b16 %v682, %v680
        %v701 = vpack.c.b16 %v683, %v681
        %v702 = vpack.c.b16 %v686, %v684
        %v703 = vpack.c.b16 %v687, %v685
        %720 = vmatprep.subr.bf16.mxu0 %v689
        %721 = vmatpush1.bf16.msra.mxu0 %v688
        %722 = vmatprep.subr.bf16.mxu0 %v691
        %723 = vmatpush1.bf16.msra.mxu0 %v690
        %724 = vmatprep.subr.bf16.mxu0 %v693
        %725 = vmatpush1.bf16.msra.mxu0 %v692
        %726 = vmatprep.subr.bf16.mxu0 %v695
        %727 = vmatpush1.bf16.msra.mxu0 %v694
        %728 = vmatprep.subr.bf16.mxu0 %v697
        %729 = vmatpush1.bf16.msra.mxu0 %v696
        %730 = vmatprep.subr.bf16.mxu0 %v699
        %731 = vmatpush1.bf16.msra.mxu0 %v698
        %732 = vmatprep.subr.bf16.mxu0 %v701
        %733 = vmatpush1.bf16.msra.mxu0 %v700
        %734 = vmatprep.subr.bf16.mxu0 %v703
        %735 = vmatpush1.bf16.msra.mxu0 %v702
        %736 = vmatprep.subr.bf16.mxu0 0
        %737 = vmatpush1.bf16.msra.mxu0 0
        %738 = vmatprep.subr.bf16.mxu0 0
        %739 = vmatpush1.bf16.msra.mxu0 0
        %740 = vmatprep.subr.bf16.mxu0 0
        %741 = vmatpush1.bf16.msra.mxu0 0
        %742 = vmatprep.subr.bf16.mxu0 0
        %743 = vmatpush1.bf16.msra.mxu0 0
        %744 = vmatprep.subr.bf16.mxu0 0
        %745 = vmatpush1.bf16.msra.mxu0 0
        %746 = vmatprep.subr.bf16.mxu0 0
        %747 = vmatpush1.bf16.msra.mxu0 0
        %748 = vmatprep.subr.bf16.mxu0 0
        %749 = vmatpush1.bf16.msra.mxu0 0
        %750 = vmatprep.subr.bf16.mxu0 0
        %751 = vmatpush1.bf16.msra.mxu0 0
        %752 = vmatprep.mubr.bf16.mxu0 0
        %753 = vmatmul.mubr.bf16.gmra.mrb[0].mxu0 %v485
        %v754 = vpop.f32.mrb[0].mxu0
        %v755 = vadd.f32 %v634, %v754
        %v756 = vpop.f32.mrb[0].mxu0
        %v757 = vadd.f32 %v636, %v756
        %v758 = vpop.f32.mrb[0].mxu0
        %v759 = vpop.f32.mrb[0].mxu0
        %760 = vdwg.mxu0
        %v761 = vld [vmem:[%s6] sm:$0x3]
        %v763 = vlaneseq
        %v764 = vshrl.u32 %v763, 7
        %v765 = vsub.s32 0, %v764
        %v766 = vrot.slane %v761, %v765
        %v767 = vlaneseq
        %v768 = vshrl.u32 %v767, 7
        %v769 = vsub.s32 1, %v768
        %v770 = vrot.slane %v761, %v769
        %v773 = vadd.f32 %v755, %v766
        %v774 = vadd.f32 %v757, %v770
        %v775 = vpack.c.bf16 %v773, %v773
        %v776 = vpack.c.bf16 %v774, %v774
        %v777 = vld [vmem:[#allocation10] sm:$0xf]
        %v778 = vld [vmem:[#allocation10 + $0x4] sm:$0xf]
        %v779 = vld [vmem:[#allocation10 + $0x8] sm:$0xf]
        %v780 = vld [vmem:[#allocation10 + $0xc] sm:$0xf]
        %v781 = vld [vmem:[#allocation10 + $0x10] sm:$0xf]
        %v782 = vld [vmem:[#allocation10 + $0x14] sm:$0xf]
        %v783 = vld [vmem:[#allocation10 + $0x18] sm:$0xf]
        %v784 = vld [vmem:[#allocation10 + $0x1c] sm:$0xf]
        %v785 = vld [vmem:[#allocation10 + $0x20] sm:$0xf]
        %v786 = vld [vmem:[#allocation10 + $0x24] sm:$0xf]
        %v787 = vld [vmem:[#allocation10 + $0x28] sm:$0xf]
        %v788 = vld [vmem:[#allocation10 + $0x2c] sm:$0xf]
        %v789 = vld [vmem:[#allocation10 + $0x30] sm:$0xf]
        %v790 = vld [vmem:[#allocation10 + $0x34] sm:$0xf]
        %v791 = vld [vmem:[#allocation10 + $0x38] sm:$0xf]
        %v792 = vld [vmem:[#allocation10 + $0x3c] sm:$0xf]
        %v793 = vld [vmem:[#allocation10 + $0x40] sm:$0xf]
        %v794 = vld [vmem:[#allocation10 + $0x44] sm:$0xf]
        %v795 = vld [vmem:[#allocation10 + $0x48] sm:$0xf]
        %v796 = vld [vmem:[#allocation10 + $0x4c] sm:$0xf]
        %v797 = vld [vmem:[#allocation10 + $0x50] sm:$0xf]
        %v798 = vld [vmem:[#allocation10 + $0x54] sm:$0xf]
        %v799 = vld [vmem:[#allocation10 + $0x58] sm:$0xf]
        %v800 = vld [vmem:[#allocation10 + $0x5c] sm:$0xf]
        %v801 = vld [vmem:[#allocation10 + $0x60] sm:$0xf]
        %v802 = vld [vmem:[#allocation10 + $0x64] sm:$0xf]
        %v803 = vld [vmem:[#allocation10 + $0x68] sm:$0xf]
        %v804 = vld [vmem:[#allocation10 + $0x6c] sm:$0xf]
        %v805 = vld [vmem:[#allocation10 + $0x70] sm:$0xf]
        %v806 = vld [vmem:[#allocation10 + $0x74] sm:$0xf]
        %v807 = vld [vmem:[#allocation10 + $0x78] sm:$0xf]
        %v808 = vld [vmem:[#allocation10 + $0x7c] sm:$0xf]
        %v809 = vld [vmem:[%s8] sm:$0x1]
        %v842 = vunpack.c.l.b16 %v777
        %v843 = vunpack.c.l.b16 %v778
        %v844 = vunpack.c.l.b16 %v779
        %v845 = vunpack.c.l.b16 %v780
        %v846 = vunpack.c.l.b16 %v781
        %v847 = vunpack.c.l.b16 %v782
        %v848 = vunpack.c.l.b16 %v783
        %v849 = vunpack.c.l.b16 %v784
        %v850 = vunpack.c.l.b16 %v785
        %v851 = vunpack.c.l.b16 %v786
        %v852 = vunpack.c.l.b16 %v787
        %v853 = vunpack.c.l.b16 %v788
        %v854 = vunpack.c.l.b16 %v789
        %v855 = vunpack.c.l.b16 %v790
        %v856 = vunpack.c.l.b16 %v791
        %v857 = vunpack.c.l.b16 %v792
        %v858 = vunpack.c.l.b16 %v793
        %v859 = vunpack.c.l.b16 %v794
        %v860 = vunpack.c.l.b16 %v795
        %v861 = vunpack.c.l.b16 %v796
        %v862 = vunpack.c.l.b16 %v797
        %v863 = vunpack.c.l.b16 %v798
        %v864 = vunpack.c.l.b16 %v799
        %v865 = vunpack.c.l.b16 %v800
        %v866 = vunpack.c.l.b16 %v801
        %v867 = vunpack.c.l.b16 %v802
        %v868 = vunpack.c.l.b16 %v803
        %v869 = vunpack.c.l.b16 %v804
        %v870 = vunpack.c.l.b16 %v805
        %v871 = vunpack.c.l.b16 %v806
        %v872 = vunpack.c.l.b16 %v807
        %v873 = vunpack.c.l.b16 %v808
        %v874 = vpack.c.b16 %v843, %v842
        %v875 = vpack.c.b16 %v845, %v844
        %v876 = vpack.c.b16 %v847, %v846
        %v877 = vpack.c.b16 %v849, %v848
        %v878 = vpack.c.b16 %v851, %v850
        %v879 = vpack.c.b16 %v853, %v852
        %v880 = vpack.c.b16 %v855, %v854
        %v881 = vpack.c.b16 %v857, %v856
        %v882 = vpack.c.b16 %v859, %v858
        %v883 = vpack.c.b16 %v861, %v860
        %v884 = vpack.c.b16 %v863, %v862
        %v885 = vpack.c.b16 %v865, %v864
        %v886 = vpack.c.b16 %v867, %v866
        %v887 = vpack.c.b16 %v869, %v868
        %v888 = vpack.c.b16 %v871, %v870
        %v889 = vpack.c.b16 %v873, %v872
        %906 = vmatprep.subr.bf16.mxu0 0
        %907 = vmatpush1.bf16.msra.mxu0 %v874
        %908 = vmatprep.subr.bf16.mxu0 0
        %909 = vmatpush1.bf16.msra.mxu0 %v875
        %910 = vmatprep.subr.bf16.mxu0 0
        %911 = vmatpush1.bf16.msra.mxu0 %v876
        %912 = vmatprep.subr.bf16.mxu0 0
        %913 = vmatpush1.bf16.msra.mxu0 %v877
        %914 = vmatprep.subr.bf16.mxu0 0
        %915 = vmatpush1.bf16.msra.mxu0 %v878
        %916 = vmatprep.subr.bf16.mxu0 0
        %917 = vmatpush1.bf16.msra.mxu0 %v879
        %918 = vmatprep.subr.bf16.mxu0 0
        %919 = vmatpush1.bf16.msra.mxu0 %v880
        %920 = vmatprep.subr.bf16.mxu0 0
        %921 = vmatpush1.bf16.msra.mxu0 %v881
        %922 = vmatprep.subr.bf16.mxu0 0
        %923 = vmatpush1.bf16.msra.mxu0 %v882
        %924 = vmatprep.subr.bf16.mxu0 0
        %925 = vmatpush1.bf16.msra.mxu0 %v883
        %926 = vmatprep.subr.bf16.mxu0 0
        %927 = vmatpush1.bf16.msra.mxu0 %v884
        %928 = vmatprep.subr.bf16.mxu0 0
        %929 = vmatpush1.bf16.msra.mxu0 %v885
        %930 = vmatprep.subr.bf16.mxu0 0
        %931 = vmatpush1.bf16.msra.mxu0 %v886
        %932 = vmatprep.subr.bf16.mxu0 0
        %933 = vmatpush1.bf16.msra.mxu0 %v887
        %934 = vmatprep.subr.bf16.mxu0 0
        %935 = vmatpush1.bf16.msra.mxu0 %v888
        %936 = vmatprep.subr.bf16.mxu0 0
        %937 = vmatpush1.bf16.msra.mxu0 %v889
        %938 = vmatprep.mubr.bf16.mxu0 %v776
        %939 = vmatmul.mubr.bf16.gmra.mrb[0].mxu0 %v775
        %v940 = vpop.f32.mrb[0].mxu0
        %v941 = vadd.f32 %v809, %v940
        %v942 = vpop.f32.mrb[0].mxu0
        %v943 = vpop.f32.mrb[0].mxu0
        %v944 = vpop.f32.mrb[0].mxu0
        %945 = vdwg.mxu0
        %v946 = vmax.f32 %v941, 0.0
        %v947 = vpack.c.bf16 %v946, %v946
        %v948 = vld [vmem:[#allocation11] sm:$0xff]
        %v949 = vld [vmem:[#allocation11 + $0x8] sm:$0xf]
        %v950 = vld [vmem:[#allocation11 + $0xc] sm:$0xff]
        %v951 = vld [vmem:[#allocation11 + $0x14] sm:$0xf]
        %v952 = vld [vmem:[#allocation11 + $0x18] sm:$0xff]
        %v953 = vld [vmem:[#allocation11 + $0x20] sm:$0xf]
        %v954 = vld [vmem:[#allocation11 + $0x24] sm:$0xff]
        %v955 = vld [vmem:[#allocation11 + $0x2c] sm:$0xf]
        %v956 = vld [vmem:[#allocation11 + $0x30] sm:$0xff]
        %v957 = vld [vmem:[#allocation11 + $0x38] sm:$0xf]
        %v958 = vld [vmem:[#allocation11 + $0x3c] sm:$0xff]
        %v959 = vld [vmem:[#allocation11 + $0x44] sm:$0xf]
        %v960 = vld [vmem:[#allocation11 + $0x48] sm:$0xff]
        %v961 = vld [vmem:[#allocation11 + $0x50] sm:$0xf]
        %v962 = vld [vmem:[#allocation11 + $0x54] sm:$0xff]
        %v963 = vld [vmem:[#allocation11 + $0x5c] sm:$0xf]
        %v964 = vld [vmem:[#allocation11 + $0x60] sm:$0xff]
        %v965 = vld [vmem:[#allocation11 + $0x68] sm:$0xf]
        %v966 = vld [vmem:[#allocation11 + $0x6c] sm:$0xff]
        %v967 = vld [vmem:[#allocation11 + $0x74] sm:$0xf]
        %v968 = vld [vmem:[#allocation11 + $0x78] sm:$0xff]
        %v969 = vld [vmem:[#allocation11 + $0x80] sm:$0xf]
        %v970 = vld [vmem:[#allocation11 + $0x84] sm:$0xff]
        %v971 = vld [vmem:[#allocation11 + $0x8c] sm:$0xf]
        %v972 = vld [vmem:[#allocation11 + $0x90] sm:$0xff]
        %v973 = vld [vmem:[#allocation11 + $0x98] sm:$0xf]
        %v974 = vld [vmem:[#allocation11 + $0x9c] sm:$0xff]
        %v975 = vld [vmem:[#allocation11 + $0xa4] sm:$0xf]
        %v976 = vld [vmem:[#allocation11 + $0xa8] sm:$0xff]
        %v977 = vld [vmem:[#allocation11 + $0xb0] sm:$0xf]
        %v978 = vld [vmem:[#allocation11 + $0xb4] sm:$0xff]
        %v979 = vld [vmem:[#allocation11 + $0xbc] sm:$0xf]
        %v980 = vld [vmem:[%s10] sm:$0x7]
        %v1013 = vunpack.c.l.b16 %v948
        %v1014 = vunpack.c.h.b16 %v948
        %v1015 = vunpack.c.l.b16 %v949
        %v1016 = vunpack.c.l.b16 %v950
        %v1017 = vunpack.c.h.b16 %v950
        %v1018 = vunpack.c.l.b16 %v951
        %v1019 = vunpack.c.l.b16 %v952
        %v1020 = vunpack.c.h.b16 %v952
        %v1021 = vunpack.c.l.b16 %v953
        %v1022 = vunpack.c.l.b16 %v954
        %v1023 = vunpack.c.h.b16 %v954
        %v1024 = vunpack.c.l.b16 %v955
        %v1025 = vunpack.c.l.b16 %v956
        %v1026 = vunpack.c.h.b16 %v956
        %v1027 = vunpack.c.l.b16 %v957
        %v1028 = vunpack.c.l.b16 %v958
        %v1029 = vunpack.c.h.b16 %v958
        %v1030 = vunpack.c.l.b16 %v959
        %v1031 = vunpack.c.l.b16 %v960
        %v1032 = vunpack.c.h.b16 %v960
        %v1033 = vunpack.c.l.b16 %v961
        %v1034 = vunpack.c.l.b16 %v962
        %v1035 = vunpack.c.h.b16 %v962
        %v1036 = vunpack.c.l.b16 %v963
        %v1037 = vunpack.c.l.b16 %v964
        %v1038 = vunpack.c.h.b16 %v964
        %v1039 = vunpack.c.l.b16 %v965
        %v1040 = vunpack.c.l.b16 %v966
        %v1041 = vunpack.c.h.b16 %v966
        %v1042 = vunpack.c.l.b16 %v967
        %v1043 = vunpack.c.l.b16 %v968
        %v1044 = vunpack.c.h.b16 %v968
        %v1045 = vunpack.c.l.b16 %v969
        %v1046 = vunpack.c.l.b16 %v970
        %v1047 = vunpack.c.h.b16 %v970
        %v1048 = vunpack.c.l.b16 %v971
        %v1049 = vunpack.c.l.b16 %v972
        %v1050 = vunpack.c.h.b16 %v972
        %v1051 = vunpack.c.l.b16 %v973
        %v1052 = vunpack.c.l.b16 %v974
        %v1053 = vunpack.c.h.b16 %v974
        %v1054 = vunpack.c.l.b16 %v975
        %v1055 = vunpack.c.l.b16 %v976
        %v1056 = vunpack.c.h.b16 %v976
        %v1057 = vunpack.c.l.b16 %v977
        %v1058 = vunpack.c.l.b16 %v978
        %v1059 = vunpack.c.h.b16 %v978
        %v1060 = vunpack.c.l.b16 %v979
        %v1061 = vpack.c.b16 %v1016, %v1013
        %v1062 = vpack.c.b16 %v1017, %v1014
        %v1063 = vpack.c.b16 %v1018, %v1015
        %v1064 = vpack.c.b16 %v1022, %v1019
        %v1065 = vpack.c.b16 %v1023, %v1020
        %v1066 = vpack.c.b16 %v1024, %v1021
        %v1067 = vpack.c.b16 %v1028, %v1025
        %v1068 = vpack.c.b16 %v1029, %v1026
        %v1069 = vpack.c.b16 %v1030, %v1027
        %v1070 = vpack.c.b16 %v1034, %v1031
        %v1071 = vpack.c.b16 %v1035, %v1032
        %v1072 = vpack.c.b16 %v1036, %v1033
        %v1073 = vpack.c.b16 %v1040, %v1037
        %v1074 = vpack.c.b16 %v1041, %v1038
        %v1075 = vpack.c.b16 %v1042, %v1039
        %v1076 = vpack.c.b16 %v1046, %v1043
        %v1077 = vpack.c.b16 %v1047, %v1044
        %v1078 = vpack.c.b16 %v1048, %v1045
        %v1079 = vpack.c.b16 %v1052, %v1049
        %v1080 = vpack.c.b16 %v1053, %v1050
        %v1081 = vpack.c.b16 %v1054, %v1051
        %v1082 = vpack.c.b16 %v1058, %v1055
        %v1083 = vpack.c.b16 %v1059, %v1056
        %v1084 = vpack.c.b16 %v1060, %v1057
        %v1110 = vlaneseq
        %v1111 = vshrl.u32 %v1110, 7
        %v1112 = vsub.s32 0, %v1111
        %v1113 = vrot.slane %v980, %v1112
        %v1114 = vlaneseq
        %v1115 = vshrl.u32 %v1114, 7
        %v1116 = vsub.s32 1, %v1115
        %v1117 = vrot.slane %v980, %v1116
        %v1118 = vlaneseq
        %v1119 = vshrl.u32 %v1118, 7
        %v1120 = vsub.s32 2, %v1119
        %v1121 = vrot.slane %v980, %v1120
        %1125 = vmatprep.subr.bf16.mxu0 %v1062
        %1126 = vmatpush1.bf16.msra.mxu0 %v1061
        %1127 = vmatprep.subr.bf16.mxu0 %v1065
        %1128 = vmatpush1.bf16.msra.mxu0 %v1064
        %1129 = vmatprep.subr.bf16.mxu0 %v1068
        %1130 = vmatpush1.bf16.msra.mxu0 %v1067
        %1131 = vmatprep.subr.bf16.mxu0 %v1071
        %1132 = vmatpush1.bf16.msra.mxu0 %v1070
        %1133 = vmatprep.subr.bf16.mxu0 %v1074
        %1134 = vmatpush1.bf16.msra.mxu0 %v1073
        %1135 = vmatprep.subr.bf16.mxu0 %v1077
        %1136 = vmatpush1.bf16.msra.mxu0 %v1076
        %1137 = vmatprep.subr.bf16.mxu0 %v1080
        %1138 = vmatpush1.bf16.msra.mxu0 %v1079
        %1139 = vmatprep.subr.bf16.mxu0 %v1083
        %1140 = vmatpush1.bf16.msra.mxu0 %v1082
        %1141 = vmatprep.subr.bf16.mxu0 0
        %1142 = vmatpush1.bf16.msra.mxu0 0
        %1143 = vmatprep.subr.bf16.mxu0 0
        %1144 = vmatpush1.bf16.msra.mxu0 0
        %1145 = vmatprep.subr.bf16.mxu0 0
        %1146 = vmatpush1.bf16.msra.mxu0 0
        %1147 = vmatprep.subr.bf16.mxu0 0
        %1148 = vmatpush1.bf16.msra.mxu0 0
        %1149 = vmatprep.subr.bf16.mxu0 0
        %1150 = vmatpush1.bf16.msra.mxu0 0
        %1151 = vmatprep.subr.bf16.mxu0 0
        %1152 = vmatpush1.bf16.msra.mxu0 0
        %1153 = vmatprep.subr.bf16.mxu0 0
        %1154 = vmatpush1.bf16.msra.mxu0 0
        %1155 = vmatprep.subr.bf16.mxu0 0
        %1156 = vmatpush1.bf16.msra.mxu0 0
        %1157 = vmatprep.mubr.bf16.mxu0 0
        %1158 = vmatmul.mubr.bf16.gmra.mrb[0].mxu0 %v947
        %v1159 = vpop.f32.mrb[0].mxu0
        %v1160 = vadd.f32 %v1113, %v1159
        %v1161 = vpop.f32.mrb[0].mxu0
        %v1162 = vadd.f32 %v1117, %v1161
        %v1163 = vpop.f32.mrb[0].mxu0
        %v1164 = vpop.f32.mrb[0].mxu0
        %1165 = vdwg.mxu0
        %1166 = vmatprep.subr.bf16.mxu0 0
        %1167 = vmatpush1.bf16.msra.mxu0 %v1063
        %1168 = vmatprep.subr.bf16.mxu0 0
        %1169 = vmatpush1.bf16.msra.mxu0 %v1066
        %1170 = vmatprep.subr.bf16.mxu0 0
        %1171 = vmatpush1.bf16.msra.mxu0 %v1069
        %1172 = vmatprep.subr.bf16.mxu0 0
        %1173 = vmatpush1.bf16.msra.mxu0 %v1072
        %1174 = vmatprep.subr.bf16.mxu0 0
        %1175 = vmatpush1.bf16.msra.mxu0 %v1075
        %1176 = vmatprep.subr.bf16.mxu0 0
        %1177 = vmatpush1.bf16.msra.mxu0 %v1078
        %1178 = vmatprep.subr.bf16.mxu0 0
        %1179 = vmatpush1.bf16.msra.mxu0 %v1081
        %1180 = vmatprep.subr.bf16.mxu0 0
        %1181 = vmatpush1.bf16.msra.mxu0 %v1084
        %1182 = vmatprep.subr.bf16.mxu0 0
        %1183 = vmatpush1.bf16.msra.mxu0 0
        %1184 = vmatprep.subr.bf16.mxu0 0
        %1185 = vmatpush1.bf16.msra.mxu0 0
        %1186 = vmatprep.subr.bf16.mxu0 0
        %1187 = vmatpush1.bf16.msra.mxu0 0
        %1188 = vmatprep.subr.bf16.mxu0 0
        %1189 = vmatpush1.bf16.msra.mxu0 0
        %1190 = vmatprep.subr.bf16.mxu0 0
        %1191 = vmatpush1.bf16.msra.mxu0 0
        %1192 = vmatprep.subr.bf16.mxu0 0
        %1193 = vmatpush1.bf16.msra.mxu0 0
        %1194 = vmatprep.subr.bf16.mxu0 0
        %1195 = vmatpush1.bf16.msra.mxu0 0
        %1196 = vmatprep.subr.bf16.mxu0 0
        %1197 = vmatpush1.bf16.msra.mxu0 0
        %1198 = vmatprep.mubr.bf16.mxu0 0
        %1199 = vmatmul.mubr.bf16.gmra.mrb[0].mxu0 %v947
        %v1200 = vpop.f32.mrb[0].mxu0
        %v1201 = vadd.f32 %v1121, %v1200
        %v1202 = vpop.f32.mrb[0].mxu0
        %v1203 = vpop.f32.mrb[0].mxu0
        %v1204 = vpop.f32.mrb[0].mxu0
        %1205 = vdwg.mxu0
        %v1206 = vmax.f32 %v1160, 0.0
        %vm1207 = vcmask 1040384
        %v1208 = vsel %vm1207, %v1162, -inf
        %v1209 = vsel %vm1207, %v1201, -inf
        %v1210 = vmax.f32 %v1208, %v1209
        %1211 = vmax.xlane.f32.xlu0 %v1210
        %v1212 = vpop.xlane.xlu0 %1211
        %v1213 = vsub.f32 %v1162, %v1212
        %v1214 = vsub.f32 %v1201, %v1212
        %v1215 = vmul.f32 %v1213, 1.442695
        %v1216 = vpow.pop %v1215
        %v1217 = vmul.f32 %v1214, 1.442695
        %v1218 = vpow.pop %v1217
        %v1219 = vsel %vm1207, %v1216, 0.0
        %v1220 = vsel %vm1207, %v1218, 0.0
        %v1221 = vadd.f32 %v1219, %v1220
        %1222 = vadd.xlane.f32.xlu0 %v1221
        %v1223 = vpop.xlane.xlu0 %1222
        %v1224 = vlog2.pop %v1223
        %v1225 = vmul.f32 %v1224, 0.6931472
        %v1226 = vsub.f32 %v1213, %v1225
        %v1227 = vsub.f32 %v1214, %v1225
        %v1230 = vcombine.low %v1226, %v1227
        %v1232 = vunpack.c.l.s4 1966171168
        %v1233 = vunpack.c.0.s8 %v1232
        %v1234 = vlaneseq
        %v1235 = vshrl.u32 %v1234, 7
        %v1236 = vsub.s32 %v1233, %v1235
        %v1237 = vrot.slane %v1230, %v1236
        %v1239 = vunpack.c.l.s4 1966171168
        %v1240 = vunpack.c.0.s8 %v1239
        %v1241 = vlaneseq
        %v1242 = vshrl.u32 %v1241, 7
        %v1243 = vsub.s32 %v1240, %v1242
        %v1244 = vrot.slane %v1237, %v1243
        %v1246 = vlaneseq
        %vm1247 = vcmp.ge.s32.totalorder %v1246, 0
        %vm1248 = vcmp.lt.s32.totalorder %v1246, 256
        %vm1249 = vmand %vm1247, %vm1248
        %1250 = vst.msk [vmem:[%s461] sm:$0x3] %vm1249, %v1244
        %1251 = vst [vmem:[#allocation14] sm:$0x1] %v1206
        %1252 = vst [vmem:[#allocation2] sm:$0x1] %v1206
        %s1253 = sand.u32 %s271, 1
        %s1254 = scalar_lea.sflag [#allocation5], %s1253
        %s1255 = sand.u32 %s271, 1
        %s1256 = smul.addr %s1255, 2
        %s1257 = scalar_lea.vmem [#allocation13], %s1256
        // Predicated region
        $region89: #{tpu_custom_call.1} parent=63 // pred_check
          %p1258 = pneg %p281
        $region90: #{tpu_custom_call.1} parent=63 // pred_check_branch
          %1260 = sbr.rel (%p1258) target = $region92
        $region91: #{tpu_custom_call.1} parent=63 // pred_region
          %s1262 = ssub.s32 32, 32
          %1263 = vsyncadd %s1254, %s1262
          %s1264 = smul.addr %s32, 2
          %s1265 = smul.addr %s1264, 16
          %s1266 = scalar_lea.hbm %s11, %s1265
          %s1268 = sshll.u32 %s1257, 4
          %s1269 = int_to_ptr.vmem [resolvable:$true] %s1268
          %1271 = dma.vmem_to_hbm [thread:$0]  %s1269, 32, %s1266, %s1254
        $region92: #{tpu_custom_call.1} parent=63 // pred_fallthru
          _
        // Predicated region
        $region93: #{tpu_custom_call.1} parent=63 // pred_check
          %p1272 = pneg %p302
        $region94: #{tpu_custom_call.1} parent=63 // pred_check_branch
          %1274 = sbr.rel (%p1272) target = $region96
        $region95: #{tpu_custom_call.1} parent=63 // pred_region
          %s1276 = ssub.s32 16, 16
          %1277 = vsyncadd [#allocation15], %s1276
          %s1279 = sshll.u32 [#allocation14], 4
          %s1280 = int_to_ptr.vmem [resolvable:$true] %s1279
          %1282 = dma.vmem_to_hbm [thread:$0]  %s1280, 16, %s12, [#allocation15]
        $region96: #{tpu_custom_call.1} parent=63 // pred_fallthru
          _
        // Predicated region
        $region97: #{tpu_custom_call.1} parent=63 // pred_check
          %p1283 = pneg %p302
        $region98: #{tpu_custom_call.1} parent=63 // pred_check_branch
          %1285 = sbr.rel (%p1283) target = $region100
        $region99: #{tpu_custom_call.1} parent=63 // pred_region
          %1286 = dma.done [#allocation15], 16
        $region100: #{tpu_custom_call.1} parent=63 // pred_fallthru
          _
      $region64: #{tpu_custom_call.1} parent=5 // pred_fallthru
        _
      %p1287 = scmp.le.s32.totalorder 2, %s27
      // Predicated region
      $region101: #{tpu_custom_call.1} parent=5 // pred_check
        %p1288 = pneg %p1287
      $region102: #{tpu_custom_call.1} parent=5 // pred_check_branch
        %1290 = sbr.rel (%p1288) target = $region104
      $region103: #{tpu_custom_call.1} parent=5 // pred_region
        %s1291 = ssub.s32 %s27, 2
        // Predicated region
        $region105: #{tpu_custom_call.1} parent=103 // pred_check
          %p1292 = pneg %p287
        $region106: #{tpu_custom_call.1} parent=103 // pred_check_branch
          %1294 = sbr.rel (%p1292) target = $region108
        $region107: #{tpu_custom_call.1} parent=103 // pred_region
          %s1295 = sand.u32 %s272, 1
          %s1296 = scalar_lea.sflag [#allocation5], %s1295
          %s1297 = sand.u32 %s272, 1
          %s1298 = smul.addr %s1297, 2
          %s1299 = scalar_lea.vmem [#allocation13], %s1298
          %1300 = dma.done %s1296, 32
        $region108: #{tpu_custom_call.1} parent=103 // pred_fallthru
          _
      $region104: #{tpu_custom_call.1} parent=5 // pred_fallthru
        _
    $region6: #{tpu_custom_call.1} parent=1 // loop_footer
      %s31 = sadd.s32 1, %s27
    $region7: #{tpu_custom_call.1} parent=1 // loop_footer_branch
      %26 = sbr.rel target = $region3
    $region8: #{tpu_custom_call.1} parent=1 // loop_exit
      _
    %1301 = vsyncpa [#allocation4], 1
    %s1302 = scalar_lea.sflag [#allocation4], 1
    %1303 = vsyncpa %s1302, 1
    %1304 = vsyncpa [#allocation9], 1
    %1305 = vsyncpa [#allocation12], 1
    %1306 = vsyncpa [#allocation5], 1
    %s1307 = scalar_lea.sflag [#allocation5], 1
    %1308 = vsyncpa %s1307, 1
    %1309 = vsyncpa [#allocation15], 1
    %1310 = vsyncpa [#allocation6], 1
    %s1311 = scalar_lea.sflag [#allocation6], 1
    %1312 = vsyncpa %s1311, 1

</llo_original>
